<compile_context>
chip_gen: v5e
topology: v5e:2x2
jax: 0.10.0
libtpu: 0.0.40
codegen_flags: <defaults>
</compile_context>

<pallas_src>
import functools

import jax
import jax.numpy as jnp
from jax.experimental import pallas as pl
from jax.experimental.pallas import tpu as pltpu


def _round_up(n, m):
    return ((n + m - 1) // m) * m


def _pad_axis_to(a, axis, target):
    extra = target - a.shape[axis]
    if extra <= 0:
        return a
    widths = [(0, 0)] * a.ndim
    widths[axis] = (0, extra)
    return jnp.pad(a, widths)


# ---------------------------------------------------------------------------
# Kernel
# ---------------------------------------------------------------------------

def _spark_kernel(x_ref, w1_ref, w2_ref, w3_ref, w4_ref, w5_ref, w6_ref,
                  out_ref, pad_ref, *, H, W, off0, matmul_dtype):
    HW = H * W
    md = matmul_dtype

    # Zero the halo scratch once.  Scratch persists across grid (batch) steps
    # and the halo lanes [off0-W-1, off0) / [off0+HW, off0+HW+W+1) are never
    # written, so this single init keeps them zero for the whole call.
    @pl.when(pl.program_id(0) == 0)
    def _zero_scratch():
        pad_ref[...] = jnp.zeros(pad_ref.shape, pad_ref.dtype)

    # Column index of each flattened pixel (lane dim); used to zero the values
    # the +-1 horizontal taps pick up by wrapping across row boundaries.
    col = jax.lax.broadcasted_iota(jnp.int32, (1, HW), 1) % W
    keep_l = col != 0          # reading the (w-1) neighbour is valid
    keep_r = col != (W - 1)    # reading the (w+1) neighbour is valid

    def conv3x3(a, w_ref):
        """a: (cin_p, HW) f32.  w_ref: (cout_p, 9*cin_p) im2col weights (md).
        Returns (cout_p, HW) f32 (MXU accumulates over the 9 taps)."""
        cout_p, k9 = w_ref.shape
        cin_p = k9 // 9
        assert a.shape[0] == cin_p and a.shape[1] == HW
        a_md = a.astype(md)
        # Interior store at a lane-aligned offset (off0 % 128 == 0) -> unmasked.
        pad_ref[0:cin_p, off0:off0 + HW] = a_md
        slabs = []
        for dy in (-1, 0, 1):
            for dx in (-1, 0, 1):
                if dy == 0 and dx == 0:
                    s = a_md                               # skip the round trip
                else:
                    o = off0 + dy * W + dx
                    s = pad_ref[0:cin_p, o:o + HW]
                    if dx == -1:
                        s = jnp.where(keep_l, s, jnp.zeros_like(s))
                    elif dx == 1:
                        s = jnp.where(keep_r, s, jnp.zeros_like(s))
                slabs.append(s)
        patches = jnp.concatenate(slabs, axis=0)           # (9*cin_p, HW)
        return jnp.dot(w_ref[...], patches,
                       preferred_element_type=jnp.float32)

    def conv1x1(a, w_ref):
        """a: (cin_p, HW) f32.  w_ref: (cout_p, cin_p)."""
        return jnp.dot(w_ref[...], a.astype(md),
                       preferred_element_type=jnp.float32)

    relu = lambda t: jnp.maximum(t, 0.0)                   # elementwise in f32

    x = x_ref[0].astype(jnp.float32)                       # (C2p, HW)
    y = relu(conv3x3(x, w1_ref))                           # 2c -> 2c
    y = relu(conv1x1(y, w2_ref))                           # 2c -> c
    y = relu(conv3x3(y, w3_ref))                           # c  -> 2c
    z = x + y                                              # residual (f32)
    z = relu(conv3x3(z, w4_ref))                           # 2c -> c
    z = relu(conv1x1(z, w5_ref))                           # c  -> c/4
    o = conv3x3(z, w6_ref)                                 # c/4 -> 1 (row 0)
    out_ref[0] = o[0:1, :].astype(out_ref.dtype)           # lane-dense (1, HW)


# ---------------------------------------------------------------------------
# Host-side wrapper
# ---------------------------------------------------------------------------

def spark_netv3_forward(x, weights, training_mask, *, matmul_dtype=jnp.bfloat16):
    """x: (B, 2*coils, H, W) NCHW f32.  weights: dict w1..w6 in PyTorch OIHW
    layout (conv2/conv5 are 1x1, all bias=False).  training_mask: (H, W).
    Returns (out, loss_out), each (B, 1, H, W), matching SPARK_Netv3.forward."""
    B, C2, H, W = x.shape
    HW = H * W
    w1, w2, w3, w4, w5, w6 = (weights[k] for k in ("w1", "w2", "w3", "w4", "w5", "w6"))
    C = w2.shape[0]            # coils
    C4 = w5.shape[0]           # coils // 4

    # Channel pad granularity = one packed sublane tile of the matmul dtype.
    cpad = max(8, 32 // jnp.dtype(matmul_dtype).itemsize)  # 8 (f32) / 16 (bf16)
    C2p = _round_up(C2, cpad)
    Cp = _round_up(C, cpad)
    C4p = _round_up(C4, cpad)
    Co6p = cpad                # conv6's single output channel (row 0 is real)

    off0 = _round_up(W + 1, 128)          # lane-aligned interior offset
    padw = off0 + HW + off0               # halo >= W+1 lanes on each side
    cmax = max(C2p, Cp, C4p)

    # Host-side layout plumbing (cheap XLA ops): NCHW -> (C, H*W) with spatial
    # in lanes; OIHW -> im2col (Cout_p, 9*Cin_p) / (Cout_p, Cin_p); weights
    # pre-cast to the matmul dtype so in-kernel weight casts are no-ops.
    x_flat = _pad_axis_to(x.reshape(B, C2, HW), 1, C2p)

    def im2col_w(w, cin_p, cout_p):
        wt = jnp.transpose(w, (2, 3, 1, 0))                 # (3,3,cin,cout)
        wt = _pad_axis_to(wt, 2, cin_p)                     # (3,3,cin_p,cout)
        wt = jnp.transpose(wt.reshape(9 * cin_p, w.shape[0]), (1, 0))
        return _pad_axis_to(wt, 0, cout_p).astype(matmul_dtype)

    def mat_w(w, cin_p, cout_p):
        m = w[:, :, 0, 0]                                   # (cout, cin)
        m = _pad_axis_to(_pad_axis_to(m, 1, cin_p), 0, cout_p)
        return m.astype(matmul_dtype)

    w1m = im2col_w(w1, C2p, C2p)
    w2m = mat_w(w2, C2p, Cp)
    w3m = im2col_w(w3, Cp, C2p)
    w4m = im2col_w(w4, C2p, Cp)
    w5m = mat_w(w5, Cp, C4p)
    w6m = im2col_w(w6, C4p, Co6p)

    def resident(a):  # full-array block, constant index -> stays VMEM-resident
        return pl.BlockSpec(a.shape, lambda b: (0, 0))

    out_flat = pl.pallas_call(
        functools.partial(_spark_kernel, H=H, W=W, off0=off0,
                          matmul_dtype=matmul_dtype),
        out_shape=jax.ShapeDtypeStruct((B, 1, HW), x.dtype),
        grid=(B,),  # one image per grid step, pipelined over batch
        in_specs=[
            pl.BlockSpec((1, C2p, HW), lambda b: (b, 0, 0)),
            resident(w1m), resident(w2m), resident(w3m),
            resident(w4m), resident(w5m), resident(w6m),
        ],
        out_specs=pl.BlockSpec((1, 1, HW), lambda b: (b, 0, 0)),
        scratch_shapes=[pltpu.VMEM((cmax, padw), matmul_dtype)],
        compiler_params=pltpu.CompilerParams(
            dimension_semantics=("parallel",)),
    )(x_flat, w1m, w2m, w3m, w4m, w5m, w6m)

    out = out_flat.reshape(B, 1, H, W)
    # Trivial elementwise multiply kept outside the kernel (halves kernel HBM
    # writes); matches `out * self.trainingMask` broadcast semantics.
    loss_out = out * training_mask
    return out, loss_out


# ---------------------------------------------------------------------------
# Pure-JAX reference + self-test
# ---------------------------------------------------------------------------

def _conv_ref(x, w, pad):
    return jax.lax.conv_general_dilated(
        x, w, window_strides=(1, 1),
        padding=[(pad, pad), (pad, pad)],
        dimension_numbers=("NCHW", "OIHW", "NCHW"),
        precision=jax.lax.Precision.HIGHEST)


def reference_forward(x, weights, training_mask):
    w1, w2, w3, w4, w5, w6 = (weights[k] for k in ("w1", "w2", "w3", "w4", "w5", "w6"))
    relu = jax.nn.relu
    y = relu(_conv_ref(x, w1, 1))
    y = relu(_conv_ref(y, w2, 0))
    y = relu(_conv_ref(y, w3, 1))
    z = x + y
    z = relu(_conv_ref(z, w4, 1))
    z = relu(_conv_ref(z, w5, 0))
    out = _conv_ref(z, w6, 1)
    return out, out * training_mask


if __name__ == "__main__":
    coils, ksize = 8, 3          # coils*2 = 16 channels, coils//4 = 2
    B, H, W = 2, 16, 16
    C2 = coils * 2

    key = jax.random.PRNGKey(0)
    kx, k1, k2, k3, k4, k5, k6, km = jax.random.split(key, 8)
    x = jax.random.normal(kx, (B, C2, H, W), jnp.float32)

    def wgt(k, cout, cin, kk):
        bound = 1.0 / jnp.sqrt(jnp.float32(cin * kk * kk))
        return jax.random.uniform(k, (cout, cin, kk, kk), jnp.float32,
                                  minval=-bound, maxval=bound)

    weights = {
        "w1": wgt(k1, C2, C2, ksize),
        "w2": wgt(k2, coils, C2, 1),
        "w3": wgt(k3, C2, coils, ksize),
        "w4": wgt(k4, coils, C2, ksize),
        "w5": wgt(k5, coils // 4, coils, 1),
        "w6": wgt(k6, 1, coils // 4, ksize),
    }
    training_mask = jax.random.bernoulli(km, 0.5, (H, W)).astype(jnp.float32)

    ref_out, ref_loss = reference_forward(x, weights, training_mask)

    # Default (bf16 MXU fast path, f32 accumulation).
    out, loss_out = jax.jit(spark_netv3_forward)(x, weights, training_mask)
    out, loss_out = jax.block_until_ready((out, loss_out))
    assert out.shape == (B, 1, H, W) and loss_out.shape == (B, 1, H, W)
    assert bool(jnp.allclose(out, ref_out, atol=5e-2, rtol=5e-2)), "bf16 out mismatch"
    assert bool(jnp.allclose(loss_out, ref_loss, atol=5e-2, rtol=5e-2)), "bf16 loss mismatch"

    # f32 matmul path: tight numerical check of the im2col/mask algorithm.
    f32_fwd = jax.jit(functools.partial(spark_netv3_forward,
                                        matmul_dtype=jnp.float32))
    out32, loss32 = f32_fwd(x, weights, training_mask)
    out32, loss32 = jax.block_until_ready((out32, loss32))
    assert bool(jnp.allclose(out32, ref_out, atol=2e-3, rtol=2e-3)), "f32 out mismatch"
    assert bool(jnp.allclose(loss32, ref_loss, atol=2e-3, rtol=2e-3)), "f32 loss mismatch"

    print("KERNEL_OK")
</pallas_src>

<mosaic_0001>
module attributes {stable_mosaic.version = 11 : i64} {
  func.func @_spark_kernel(%arg0: i32, %arg1: memref<1x16x256xf32, #tpu.memory_space<vmem>>, %arg2: memref<16x144xbf16, #tpu.memory_space<vmem>>, %arg3: memref<16x16xbf16, #tpu.memory_space<vmem>>, %arg4: memref<16x144xbf16, #tpu.memory_space<vmem>>, %arg5: memref<16x144xbf16, #tpu.memory_space<vmem>>, %arg6: memref<16x16xbf16, #tpu.memory_space<vmem>>, %arg7: memref<16x144xbf16, #tpu.memory_space<vmem>>, %arg8: memref<1x1x256xf32, #tpu.memory_space<vmem>>, %arg9: memref<16x512xbf16, #tpu.memory_space<vmem>>) attributes {dimension_semantics = [#tpu.dimension_semantics<parallel>], iteration_bounds = array<i64: 2>, scalar_prefetch = 0 : i64, scratch_operands = 1 : i64, tpu.core_type = #tpu.core_type<tc>, window_params = [{transform_indices = @transform_0, window_bounds = array<i64: 1, 16, 256>}, {pipeline_mode = #tpu.pipeline_mode<synchronous>, transform_indices = @transform_1, window_bounds = array<i64: 16, 144>}, {pipeline_mode = #tpu.pipeline_mode<synchronous>, transform_indices = @transform_2, window_bounds = array<i64: 16, 16>}, {pipeline_mode = #tpu.pipeline_mode<synchronous>, transform_indices = @transform_3, window_bounds = array<i64: 16, 144>}, {pipeline_mode = #tpu.pipeline_mode<synchronous>, transform_indices = @transform_4, window_bounds = array<i64: 16, 144>}, {pipeline_mode = #tpu.pipeline_mode<synchronous>, transform_indices = @transform_5, window_bounds = array<i64: 16, 16>}, {pipeline_mode = #tpu.pipeline_mode<synchronous>, transform_indices = @transform_6, window_bounds = array<i64: 16, 144>}, {transform_indices = @transform_7, window_bounds = array<i64: 1, 1, 256>}]} {
    %c0_i32 = arith.constant 0 : i32
    %0 = arith.cmpi eq, %arg0, %c0_i32 : i32
    %1 = arith.extui %0 : i1 to i32
    %c0_i32_0 = arith.constant 0 : i32
    %2 = arith.cmpi ne, %1, %c0_i32_0 : i32
    scf.if %2 {
      %cst_120 = arith.constant 0.000000e+00 : bf16
      %195 = vector.broadcast %cst_120 : bf16 to vector<16x512xbf16>
      %c0_121 = arith.constant 0 : index
      %c0_122 = arith.constant 0 : index
      %196 = vector.load %arg9[%c0_121, %c0_122] : memref<16x512xbf16, #tpu.memory_space<vmem>>, vector<16x512xbf16>
      tpu.vector_store %arg9[%c0_121, %c0_122], %195 {strides = array<i32>} : memref<16x512xbf16, #tpu.memory_space<vmem>>, vector<16x512xbf16>,
    } else {
    }
    %3 = tpu.iota {dimensions = array<i32: 1>} : vector<1x256xi32>
    %c16_i32 = arith.constant 16 : i32
    %c0_i32_1 = arith.constant 0 : i32
    %4 = arith.cmpi eq, %c16_i32, %c0_i32_1 : i32
    %c1_i32 = arith.constant 1 : i32
    %5 = arith.select %4, %c1_i32, %c16_i32 : i32
    %6 = vector.broadcast %5 : i32 to vector<1x256xi32>
    %7 = arith.remsi %3, %6 : vector<1x256xi32>
    %c0_i32_2 = arith.constant 0 : i32
    %8 = vector.broadcast %c0_i32_2 : i32 to vector<1x256xi32>
    %9 = arith.cmpi ne, %7, %8 : vector<1x256xi32>
    %c0_i32_3 = arith.constant 0 : i32
    %10 = vector.broadcast %c0_i32_3 : i32 to vector<1x256xi32>
    %11 = arith.cmpi slt, %7, %10 : vector<1x256xi32>
    %c0_i32_4 = arith.constant 0 : i32
    %12 = arith.cmpi slt, %5, %c0_i32_4 : i32
    %13 = vector.broadcast %12 : i1 to vector<1x256xi1>
    %14 = vector.broadcast %13 : vector<1x256xi1> to vector<1x256xi1>
    %15 = arith.xori %11, %14 : vector<1x256xi1>
    %16 = arith.andi %15, %9 : vector<1x256xi1>
    %17 = vector.broadcast %5 : i32 to vector<1x256xi32>
    %18 = arith.addi %7, %17 : vector<1x256xi32>
    %19 = arith.select %16, %18, %7 : vector<1x256xi1>, vector<1x256xi32>
    %c0_i32_5 = arith.constant 0 : i32
    %20 = vector.broadcast %c0_i32_5 : i32 to vector<1x256xi32>
    %21 = arith.cmpi ne, %19, %20 : vector<1x256xi32>
    %c15_i32 = arith.constant 15 : i32
    %22 = vector.broadcast %c15_i32 : i32 to vector<1x256xi32>
    %23 = arith.cmpi ne, %19, %22 : vector<1x256xi32>
    %c0 = arith.constant 0 : index
    %c0_6 = arith.constant 0 : index
    %c0_7 = arith.constant 0 : index
    %24 = vector.load %arg1[%c0, %c0_6, %c0_7] : memref<1x16x256xf32, #tpu.memory_space<vmem>>, vector<1x16x256xf32>
    %25 = vector.shape_cast %24 : vector<1x16x256xf32> to vector<16x256xf32>
    %26 = arith.truncf %25 : vector<16x256xf32> to vector<16x256xbf16>
    %c0_8 = arith.constant 0 : index
    %c128 = arith.constant 128 : index
    %27 = vector.load %arg9[%c0_8, %c128] : memref<16x512xbf16, #tpu.memory_space<vmem>>, vector<16x256xbf16>
    tpu.vector_store %arg9[%c0_8, %c128], %26 {strides = array<i32>} : memref<16x512xbf16, #tpu.memory_space<vmem>>, vector<16x256xbf16>,
    %c0_9 = arith.constant 0 : index
    %c111 = arith.constant 111 : index
    %28 = vector.load %arg9[%c0_9, %c111] : memref<16x512xbf16, #tpu.memory_space<vmem>>, vector<16x256xbf16>
    %cst = arith.constant 0.000000e+00 : bf16
    %29 = vector.broadcast %cst : bf16 to vector<16x256xbf16>
    %30 = vector.shape_cast %21 : vector<1x256xi1> to vector<1x256xi1>
    %31 = vector.broadcast %30 : vector<1x256xi1> to vector<16x256xi1>
    %32 = arith.select %31, %28, %29 : vector<16x256xi1>, vector<16x256xbf16>
    %c0_10 = arith.constant 0 : index
    %c112 = arith.constant 112 : index
    %33 = vector.load %arg9[%c0_10, %c112] : memref<16x512xbf16, #tpu.memory_space<vmem>>, vector<16x256xbf16>
    %c0_11 = arith.constant 0 : index
    %c113 = arith.constant 113 : index
    %34 = vector.load %arg9[%c0_11, %c113] : memref<16x512xbf16, #tpu.memory_space<vmem>>, vector<16x256xbf16>
    %cst_12 = arith.constant 0.000000e+00 : bf16
    %35 = vector.broadcast %cst_12 : bf16 to vector<16x256xbf16>
    %36 = vector.shape_cast %23 : vector<1x256xi1> to vector<1x256xi1>
    %37 = vector.broadcast %36 : vector<1x256xi1> to vector<16x256xi1>
    %38 = arith.select %37, %34, %35 : vector<16x256xi1>, vector<16x256xbf16>
    %c0_13 = arith.constant 0 : index
    %c127 = arith.constant 127 : index
    %39 = vector.load %arg9[%c0_13, %c127] : memref<16x512xbf16, #tpu.memory_space<vmem>>, vector<16x256xbf16>
    %cst_14 = arith.constant 0.000000e+00 : bf16
    %40 = vector.broadcast %cst_14 : bf16 to vector<16x256xbf16>
    %41 = vector.shape_cast %21 : vector<1x256xi1> to vector<1x256xi1>
    %42 = vector.broadcast %41 : vector<1x256xi1> to vector<16x256xi1>
    %43 = arith.select %42, %39, %40 : vector<16x256xi1>, vector<16x256xbf16>
    %c0_15 = arith.constant 0 : index
    %c129 = arith.constant 129 : index
    %44 = vector.load %arg9[%c0_15, %c129] : memref<16x512xbf16, #tpu.memory_space<vmem>>, vector<16x256xbf16>
    %cst_16 = arith.constant 0.000000e+00 : bf16
    %45 = vector.broadcast %cst_16 : bf16 to vector<16x256xbf16>
    %46 = vector.shape_cast %23 : vector<1x256xi1> to vector<1x256xi1>
    %47 = vector.broadcast %46 : vector<1x256xi1> to vector<16x256xi1>
    %48 = arith.select %47, %44, %45 : vector<16x256xi1>, vector<16x256xbf16>
    %c0_17 = arith.constant 0 : index
    %c143 = arith.constant 143 : index
    %49 = vector.load %arg9[%c0_17, %c143] : memref<16x512xbf16, #tpu.memory_space<vmem>>, vector<16x256xbf16>
    %cst_18 = arith.constant 0.000000e+00 : bf16
    %50 = vector.broadcast %cst_18 : bf16 to vector<16x256xbf16>
    %51 = vector.shape_cast %21 : vector<1x256xi1> to vector<1x256xi1>
    %52 = vector.broadcast %51 : vector<1x256xi1> to vector<16x256xi1>
    %53 = arith.select %52, %49, %50 : vector<16x256xi1>, vector<16x256xbf16>
    %c0_19 = arith.constant 0 : index
    %c144 = arith.constant 144 : index
    %54 = vector.load %arg9[%c0_19, %c144] : memref<16x512xbf16, #tpu.memory_space<vmem>>, vector<16x256xbf16>
    %c0_20 = arith.constant 0 : index
    %c145 = arith.constant 145 : index
    %55 = vector.load %arg9[%c0_20, %c145] : memref<16x512xbf16, #tpu.memory_space<vmem>>, vector<16x256xbf16>
    %cst_21 = arith.constant 0.000000e+00 : bf16
    %56 = vector.broadcast %cst_21 : bf16 to vector<16x256xbf16>
    %57 = vector.shape_cast %23 : vector<1x256xi1> to vector<1x256xi1>
    %58 = vector.broadcast %57 : vector<1x256xi1> to vector<16x256xi1>
    %59 = arith.select %58, %55, %56 : vector<16x256xi1>, vector<16x256xbf16>
    %60 = tpu.concatenate %32, %33, %38, %43, %26, %48, %53, %54, %59 in 0 : vector<16x256xbf16>, vector<16x256xbf16>, vector<16x256xbf16>, vector<16x256xbf16>, vector<16x256xbf16>, vector<16x256xbf16>, vector<16x256xbf16>, vector<16x256xbf16>, vector<16x256xbf16> -> vector<144x256xbf16>
    %c0_22 = arith.constant 0 : index
    %c0_23 = arith.constant 0 : index
    %61 = vector.load %arg2[%c0_22, %c0_23] : memref<16x144xbf16, #tpu.memory_space<vmem>>, vector<16x144xbf16>
    %cst_24 = arith.constant dense<0.000000e+00> : vector<16x256xf32>
    %62 = tpu.matmul %61, %60, %cst_24 {dimension_numbers = #tpu.dot_dimension_numbers<[1], [0], [0], [1], [0, 0, 1, 1], [], []>} : vector<16x144xbf16>, vector<144x256xbf16>, vector<16x256xf32> -> vector<16x256xf32>
    %cst_25 = arith.constant 0.000000e+00 : f32
    %63 = vector.broadcast %cst_25 : f32 to vector<16x256xf32>
    %64 = arith.maximumf %62, %63 : vector<16x256xf32>
    %c0_26 = arith.constant 0 : index
    %c0_27 = arith.constant 0 : index
    %65 = vector.load %arg3[%c0_26, %c0_27] : memref<16x16xbf16, #tpu.memory_space<vmem>>, vector<16x16xbf16>
    %66 = arith.truncf %64 : vector<16x256xf32> to vector<16x256xbf16>
    %cst_28 = arith.constant dense<0.000000e+00> : vector<16x256xf32>
    %67 = tpu.matmul %65, %66, %cst_28 {dimension_numbers = #tpu.dot_dimension_numbers<[1], [0], [0], [1], [0, 0, 1, 1], [], []>} : vector<16x16xbf16>, vector<16x256xbf16>, vector<16x256xf32> -> vector<16x256xf32>
    %cst_29 = arith.constant 0.000000e+00 : f32
    %68 = vector.broadcast %cst_29 : f32 to vector<16x256xf32>
    %69 = arith.maximumf %67, %68 : vector<16x256xf32>
    %70 = arith.truncf %69 : vector<16x256xf32> to vector<16x256xbf16>
    %c0_30 = arith.constant 0 : index
    %c128_31 = arith.constant 128 : index
    %71 = vector.load %arg9[%c0_30, %c128_31] : memref<16x512xbf16, #tpu.memory_space<vmem>>, vector<16x256xbf16>
    tpu.vector_store %arg9[%c0_30, %c128_31], %70 {strides = array<i32>} : memref<16x512xbf16, #tpu.memory_space<vmem>>, vector<16x256xbf16>,
    %c0_32 = arith.constant 0 : index
    %c111_33 = arith.constant 111 : index
    %72 = vector.load %arg9[%c0_32, %c111_33] : memref<16x512xbf16, #tpu.memory_space<vmem>>, vector<16x256xbf16>
    %cst_34 = arith.constant 0.000000e+00 : bf16
    %73 = vector.broadcast %cst_34 : bf16 to vector<16x256xbf16>
    %74 = vector.shape_cast %21 : vector<1x256xi1> to vector<1x256xi1>
    %75 = vector.broadcast %74 : vector<1x256xi1> to vector<16x256xi1>
    %76 = arith.select %75, %72, %73 : vector<16x256xi1>, vector<16x256xbf16>
    %c0_35 = arith.constant 0 : index
    %c112_36 = arith.constant 112 : index
    %77 = vector.load %arg9[%c0_35, %c112_36] : memref<16x512xbf16, #tpu.memory_space<vmem>>, vector<16x256xbf16>
    %c0_37 = arith.constant 0 : index
    %c113_38 = arith.constant 113 : index
    %78 = vector.load %arg9[%c0_37, %c113_38] : memref<16x512xbf16, #tpu.memory_space<vmem>>, vector<16x256xbf16>
    %cst_39 = arith.constant 0.000000e+00 : bf16
    %79 = vector.broadcast %cst_39 : bf16 to vector<16x256xbf16>
    %80 = vector.shape_cast %23 : vector<1x256xi1> to vector<1x256xi1>
    %81 = vector.broadcast %80 : vector<1x256xi1> to vector<16x256xi1>
    %82 = arith.select %81, %78, %79 : vector<16x256xi1>, vector<16x256xbf16>
    %c0_40 = arith.constant 0 : index
    %c127_41 = arith.constant 127 : index
    %83 = vector.load %arg9[%c0_40, %c127_41] : memref<16x512xbf16, #tpu.memory_space<vmem>>, vector<16x256xbf16>
    %cst_42 = arith.constant 0.000000e+00 : bf16
    %84 = vector.broadcast %cst_42 : bf16 to vector<16x256xbf16>
    %85 = vector.shape_cast %21 : vector<1x256xi1> to vector<1x256xi1>
    %86 = vector.broadcast %85 : vector<1x256xi1> to vector<16x256xi1>
    %87 = arith.select %86, %83, %84 : vector<16x256xi1>, vector<16x256xbf16>
    %c0_43 = arith.constant 0 : index
    %c129_44 = arith.constant 129 : index
    %88 = vector.load %arg9[%c0_43, %c129_44] : memref<16x512xbf16, #tpu.memory_space<vmem>>, vector<16x256xbf16>
    %cst_45 = arith.constant 0.000000e+00 : bf16
    %89 = vector.broadcast %cst_45 : bf16 to vector<16x256xbf16>
    %90 = vector.shape_cast %23 : vector<1x256xi1> to vector<1x256xi1>
    %91 = vector.broadcast %90 : vector<1x256xi1> to vector<16x256xi1>
    %92 = arith.select %91, %88, %89 : vector<16x256xi1>, vector<16x256xbf16>
    %c0_46 = arith.constant 0 : index
    %c143_47 = arith.constant 143 : index
    %93 = vector.load %arg9[%c0_46, %c143_47] : memref<16x512xbf16, #tpu.memory_space<vmem>>, vector<16x256xbf16>
    %cst_48 = arith.constant 0.000000e+00 : bf16
    %94 = vector.broadcast %cst_48 : bf16 to vector<16x256xbf16>
    %95 = vector.shape_cast %21 : vector<1x256xi1> to vector<1x256xi1>
    %96 = vector.broadcast %95 : vector<1x256xi1> to vector<16x256xi1>
    %97 = arith.select %96, %93, %94 : vector<16x256xi1>, vector<16x256xbf16>
    %c0_49 = arith.constant 0 : index
    %c144_50 = arith.constant 144 : index
    %98 = vector.load %arg9[%c0_49, %c144_50] : memref<16x512xbf16, #tpu.memory_space<vmem>>, vector<16x256xbf16>
    %c0_51 = arith.constant 0 : index
    %c145_52 = arith.constant 145 : index
    %99 = vector.load %arg9[%c0_51, %c145_52] : memref<16x512xbf16, #tpu.memory_space<vmem>>, vector<16x256xbf16>
    %cst_53 = arith.constant 0.000000e+00 : bf16
    %100 = vector.broadcast %cst_53 : bf16 to vector<16x256xbf16>
    %101 = vector.shape_cast %23 : vector<1x256xi1> to vector<1x256xi1>
    %102 = vector.broadcast %101 : vector<1x256xi1> to vector<16x256xi1>
    %103 = arith.select %102, %99, %100 : vector<16x256xi1>, vector<16x256xbf16>
    %104 = tpu.concatenate %76, %77, %82, %87, %70, %92, %97, %98, %103 in 0 : vector<16x256xbf16>, vector<16x256xbf16>, vector<16x256xbf16>, vector<16x256xbf16>, vector<16x256xbf16>, vector<16x256xbf16>, vector<16x256xbf16>, vector<16x256xbf16>, vector<16x256xbf16> -> vector<144x256xbf16>
    %c0_54 = arith.constant 0 : index
    %c0_55 = arith.constant 0 : index
    %105 = vector.load %arg4[%c0_54, %c0_55] : memref<16x144xbf16, #tpu.memory_space<vmem>>, vector<16x144xbf16>
    %cst_56 = arith.constant dense<0.000000e+00> : vector<16x256xf32>
    %106 = tpu.matmul %105, %104, %cst_56 {dimension_numbers = #tpu.dot_dimension_numbers<[1], [0], [0], [1], [0, 0, 1, 1], [], []>} : vector<16x144xbf16>, vector<144x256xbf16>, vector<16x256xf32> -> vector<16x256xf32>
    %cst_57 = arith.constant 0.000000e+00 : f32
    %107 = vector.broadcast %cst_57 : f32 to vector<16x256xf32>
    %108 = arith.maximumf %106, %107 : vector<16x256xf32>
    %109 = arith.addf %25, %108 : vector<16x256xf32>
    %110 = arith.truncf %109 : vector<16x256xf32> to vector<16x256xbf16>
    %c0_58 = arith.constant 0 : index
    %c128_59 = arith.constant 128 : index
    %111 = vector.load %arg9[%c0_58, %c128_59] : memref<16x512xbf16, #tpu.memory_space<vmem>>, vector<16x256xbf16>
    tpu.vector_store %arg9[%c0_58, %c128_59], %110 {strides = array<i32>} : memref<16x512xbf16, #tpu.memory_space<vmem>>, vector<16x256xbf16>,
    %c0_60 = arith.constant 0 : index
    %c111_61 = arith.constant 111 : index
    %112 = vector.load %arg9[%c0_60, %c111_61] : memref<16x512xbf16, #tpu.memory_space<vmem>>, vector<16x256xbf16>
    %cst_62 = arith.constant 0.000000e+00 : bf16
    %113 = vector.broadcast %cst_62 : bf16 to vector<16x256xbf16>
    %114 = vector.shape_cast %21 : vector<1x256xi1> to vector<1x256xi1>
    %115 = vector.broadcast %114 : vector<1x256xi1> to vector<16x256xi1>
    %116 = arith.select %115, %112, %113 : vector<16x256xi1>, vector<16x256xbf16>
    %c0_63 = arith.constant 0 : index
    %c112_64 = arith.constant 112 : index
    %117 = vector.load %arg9[%c0_63, %c112_64] : memref<16x512xbf16, #tpu.memory_space<vmem>>, vector<16x256xbf16>
    %c0_65 = arith.constant 0 : index
    %c113_66 = arith.constant 113 : index
    %118 = vector.load %arg9[%c0_65, %c113_66] : memref<16x512xbf16, #tpu.memory_space<vmem>>, vector<16x256xbf16>
    %cst_67 = arith.constant 0.000000e+00 : bf16
    %119 = vector.broadcast %cst_67 : bf16 to vector<16x256xbf16>
    %120 = vector.shape_cast %23 : vector<1x256xi1> to vector<1x256xi1>
    %121 = vector.broadcast %120 : vector<1x256xi1> to vector<16x256xi1>
    %122 = arith.select %121, %118, %119 : vector<16x256xi1>, vector<16x256xbf16>
    %c0_68 = arith.constant 0 : index
    %c127_69 = arith.constant 127 : index
    %123 = vector.load %arg9[%c0_68, %c127_69] : memref<16x512xbf16, #tpu.memory_space<vmem>>, vector<16x256xbf16>
    %cst_70 = arith.constant 0.000000e+00 : bf16
    %124 = vector.broadcast %cst_70 : bf16 to vector<16x256xbf16>
    %125 = vector.shape_cast %21 : vector<1x256xi1> to vector<1x256xi1>
    %126 = vector.broadcast %125 : vector<1x256xi1> to vector<16x256xi1>
    %127 = arith.select %126, %123, %124 : vector<16x256xi1>, vector<16x256xbf16>
    %c0_71 = arith.constant 0 : index
    %c129_72 = arith.constant 129 : index
    %128 = vector.load %arg9[%c0_71, %c129_72] : memref<16x512xbf16, #tpu.memory_space<vmem>>, vector<16x256xbf16>
    %cst_73 = arith.constant 0.000000e+00 : bf16
    %129 = vector.broadcast %cst_73 : bf16 to vector<16x256xbf16>
    %130 = vector.shape_cast %23 : vector<1x256xi1> to vector<1x256xi1>
    %131 = vector.broadcast %130 : vector<1x256xi1> to vector<16x256xi1>
    %132 = arith.select %131, %128, %129 : vector<16x256xi1>, vector<16x256xbf16>
    %c0_74 = arith.constant 0 : index
    %c143_75 = arith.constant 143 : index
    %133 = vector.load %arg9[%c0_74, %c143_75] : memref<16x512xbf16, #tpu.memory_space<vmem>>, vector<16x256xbf16>
    %cst_76 = arith.constant 0.000000e+00 : bf16
    %134 = vector.broadcast %cst_76 : bf16 to vector<16x256xbf16>
    %135 = vector.shape_cast %21 : vector<1x256xi1> to vector<1x256xi1>
    %136 = vector.broadcast %135 : vector<1x256xi1> to vector<16x256xi1>
    %137 = arith.select %136, %133, %134 : vector<16x256xi1>, vector<16x256xbf16>
    %c0_77 = arith.constant 0 : index
    %c144_78 = arith.constant 144 : index
    %138 = vector.load %arg9[%c0_77, %c144_78] : memref<16x512xbf16, #tpu.memory_space<vmem>>, vector<16x256xbf16>
    %c0_79 = arith.constant 0 : index
    %c145_80 = arith.constant 145 : index
    %139 = vector.load %arg9[%c0_79, %c145_80] : memref<16x512xbf16, #tpu.memory_space<vmem>>, vector<16x256xbf16>
    %cst_81 = arith.constant 0.000000e+00 : bf16
    %140 = vector.broadcast %cst_81 : bf16 to vector<16x256xbf16>
    %141 = vector.shape_cast %23 : vector<1x256xi1> to vector<1x256xi1>
    %142 = vector.broadcast %141 : vector<1x256xi1> to vector<16x256xi1>
    %143 = arith.select %142, %139, %140 : vector<16x256xi1>, vector<16x256xbf16>
    %144 = tpu.concatenate %116, %117, %122, %127, %110, %132, %137, %138, %143 in 0 : vector<16x256xbf16>, vector<16x256xbf16>, vector<16x256xbf16>, vector<16x256xbf16>, vector<16x256xbf16>, vector<16x256xbf16>, vector<16x256xbf16>, vector<16x256xbf16>, vector<16x256xbf16> -> vector<144x256xbf16>
    %c0_82 = arith.constant 0 : index
    %c0_83 = arith.constant 0 : index
    %145 = vector.load %arg5[%c0_82, %c0_83] : memref<16x144xbf16, #tpu.memory_space<vmem>>, vector<16x144xbf16>
    %cst_84 = arith.constant dense<0.000000e+00> : vector<16x256xf32>
    %146 = tpu.matmul %145, %144, %cst_84 {dimension_numbers = #tpu.dot_dimension_numbers<[1], [0], [0], [1], [0, 0, 1, 1], [], []>} : vector<16x144xbf16>, vector<144x256xbf16>, vector<16x256xf32> -> vector<16x256xf32>
    %cst_85 = arith.constant 0.000000e+00 : f32
    %147 = vector.broadcast %cst_85 : f32 to vector<16x256xf32>
    %148 = arith.maximumf %146, %147 : vector<16x256xf32>
    %c0_86 = arith.constant 0 : index
    %c0_87 = arith.constant 0 : index
    %149 = vector.load %arg6[%c0_86, %c0_87] : memref<16x16xbf16, #tpu.memory_space<vmem>>, vector<16x16xbf16>
    %150 = arith.truncf %148 : vector<16x256xf32> to vector<16x256xbf16>
    %cst_88 = arith.constant dense<0.000000e+00> : vector<16x256xf32>
    %151 = tpu.matmul %149, %150, %cst_88 {dimension_numbers = #tpu.dot_dimension_numbers<[1], [0], [0], [1], [0, 0, 1, 1], [], []>} : vector<16x16xbf16>, vector<16x256xbf16>, vector<16x256xf32> -> vector<16x256xf32>
    %cst_89 = arith.constant 0.000000e+00 : f32
    %152 = vector.broadcast %cst_89 : f32 to vector<16x256xf32>
    %153 = arith.maximumf %151, %152 : vector<16x256xf32>
    %154 = arith.truncf %153 : vector<16x256xf32> to vector<16x256xbf16>
    %c0_90 = arith.constant 0 : index
    %c128_91 = arith.constant 128 : index
    %155 = vector.load %arg9[%c0_90, %c128_91] : memref<16x512xbf16, #tpu.memory_space<vmem>>, vector<16x256xbf16>
    tpu.vector_store %arg9[%c0_90, %c128_91], %154 {strides = array<i32>} : memref<16x512xbf16, #tpu.memory_space<vmem>>, vector<16x256xbf16>,
    %c0_92 = arith.constant 0 : index
    %c111_93 = arith.constant 111 : index
    %156 = vector.load %arg9[%c0_92, %c111_93] : memref<16x512xbf16, #tpu.memory_space<vmem>>, vector<16x256xbf16>
    %cst_94 = arith.constant 0.000000e+00 : bf16
    %157 = vector.broadcast %cst_94 : bf16 to vector<16x256xbf16>
    %158 = vector.shape_cast %21 : vector<1x256xi1> to vector<1x256xi1>
    %159 = vector.broadcast %158 : vector<1x256xi1> to vector<16x256xi1>
    %160 = arith.select %159, %156, %157 : vector<16x256xi1>, vector<16x256xbf16>
    %c0_95 = arith.constant 0 : index
    %c112_96 = arith.constant 112 : index
    %161 = vector.load %arg9[%c0_95, %c112_96] : memref<16x512xbf16, #tpu.memory_space<vmem>>, vector<16x256xbf16>
    %c0_97 = arith.constant 0 : index
    %c113_98 = arith.constant 113 : index
    %162 = vector.load %arg9[%c0_97, %c113_98] : memref<16x512xbf16, #tpu.memory_space<vmem>>, vector<16x256xbf16>
    %cst_99 = arith.constant 0.000000e+00 : bf16
    %163 = vector.broadcast %cst_99 : bf16 to vector<16x256xbf16>
    %164 = vector.shape_cast %23 : vector<1x256xi1> to vector<1x256xi1>
    %165 = vector.broadcast %164 : vector<1x256xi1> to vector<16x256xi1>
    %166 = arith.select %165, %162, %163 : vector<16x256xi1>, vector<16x256xbf16>
    %c0_100 = arith.constant 0 : index
    %c127_101 = arith.constant 127 : index
    %167 = vector.load %arg9[%c0_100, %c127_101] : memref<16x512xbf16, #tpu.memory_space<vmem>>, vector<16x256xbf16>
    %cst_102 = arith.constant 0.000000e+00 : bf16
    %168 = vector.broadcast %cst_102 : bf16 to vector<16x256xbf16>
    %169 = vector.shape_cast %21 : vector<1x256xi1> to vector<1x256xi1>
    %170 = vector.broadcast %169 : vector<1x256xi1> to vector<16x256xi1>
    %171 = arith.select %170, %167, %168 : vector<16x256xi1>, vector<16x256xbf16>
    %c0_103 = arith.constant 0 : index
    %c129_104 = arith.constant 129 : index
    %172 = vector.load %arg9[%c0_103, %c129_104] : memref<16x512xbf16, #tpu.memory_space<vmem>>, vector<16x256xbf16>
    %cst_105 = arith.constant 0.000000e+00 : bf16
    %173 = vector.broadcast %cst_105 : bf16 to vector<16x256xbf16>
    %174 = vector.shape_cast %23 : vector<1x256xi1> to vector<1x256xi1>
    %175 = vector.broadcast %174 : vector<1x256xi1> to vector<16x256xi1>
    %176 = arith.select %175, %172, %173 : vector<16x256xi1>, vector<16x256xbf16>
    %c0_106 = arith.constant 0 : index
    %c143_107 = arith.constant 143 : index
    %177 = vector.load %arg9[%c0_106, %c143_107] : memref<16x512xbf16, #tpu.memory_space<vmem>>, vector<16x256xbf16>
    %cst_108 = arith.constant 0.000000e+00 : bf16
    %178 = vector.broadcast %cst_108 : bf16 to vector<16x256xbf16>
    %179 = vector.shape_cast %21 : vector<1x256xi1> to vector<1x256xi1>
    %180 = vector.broadcast %179 : vector<1x256xi1> to vector<16x256xi1>
    %181 = arith.select %180, %177, %178 : vector<16x256xi1>, vector<16x256xbf16>
    %c0_109 = arith.constant 0 : index
    %c144_110 = arith.constant 144 : index
    %182 = vector.load %arg9[%c0_109, %c144_110] : memref<16x512xbf16, #tpu.memory_space<vmem>>, vector<16x256xbf16>
    %c0_111 = arith.constant 0 : index
    %c145_112 = arith.constant 145 : index
    %183 = vector.load %arg9[%c0_111, %c145_112] : memref<16x512xbf16, #tpu.memory_space<vmem>>, vector<16x256xbf16>
    %cst_113 = arith.constant 0.000000e+00 : bf16
    %184 = vector.broadcast %cst_113 : bf16 to vector<16x256xbf16>
    %185 = vector.shape_cast %23 : vector<1x256xi1> to vector<1x256xi1>
    %186 = vector.broadcast %185 : vector<1x256xi1> to vector<16x256xi1>
    %187 = arith.select %186, %183, %184 : vector<16x256xi1>, vector<16x256xbf16>
    %188 = tpu.concatenate %160, %161, %166, %171, %154, %176, %181, %182, %187 in 0 : vector<16x256xbf16>, vector<16x256xbf16>, vector<16x256xbf16>, vector<16x256xbf16>, vector<16x256xbf16>, vector<16x256xbf16>, vector<16x256xbf16>, vector<16x256xbf16>, vector<16x256xbf16> -> vector<144x256xbf16>
    %c0_114 = arith.constant 0 : index
    %c0_115 = arith.constant 0 : index
    %189 = vector.load %arg7[%c0_114, %c0_115] : memref<16x144xbf16, #tpu.memory_space<vmem>>, vector<16x144xbf16>
    %cst_116 = arith.constant dense<0.000000e+00> : vector<16x256xf32>
    %190 = tpu.matmul %189, %188, %cst_116 {dimension_numbers = #tpu.dot_dimension_numbers<[1], [0], [0], [1], [0, 0, 1, 1], [], []>} : vector<16x144xbf16>, vector<144x256xbf16>, vector<16x256xf32> -> vector<16x256xf32>
    %191 = vector.extract_strided_slice %190 {offsets = [0, 0], sizes = [1, 256], strides = [1, 1]} : vector<16x256xf32> to vector<1x256xf32>
    %c0_117 = arith.constant 0 : index
    %c0_118 = arith.constant 0 : index
    %c0_119 = arith.constant 0 : index
    %192 = vector.load %arg8[%c0_117, %c0_118, %c0_119] : memref<1x1x256xf32, #tpu.memory_space<vmem>>, vector<1x1x256xf32>
    %193 = vector.shape_cast %192 : vector<1x1x256xf32> to vector<1x256xf32>
    %194 = vector.shape_cast %191 : vector<1x256xf32> to vector<1x1x256xf32>
    tpu.vector_store %arg8[%c0_117, %c0_118, %c0_119], %194 {strides = array<i32>} : memref<1x1x256xf32, #tpu.memory_space<vmem>>, vector<1x1x256xf32>,
    return
  }
  func.func @transform_0(%arg0: i32) -> (i32, i32, i32) {
    %c0_i32 = arith.constant 0 : i32
    %c0_i32_0 = arith.constant 0 : i32
    %c0_i32_1 = arith.constant 0 : i32
    return %arg0, %c0_i32, %c0_i32_0 : i32, i32, i32
  }
  func.func @transform_1(%arg0: i32) -> (i32, i32) {
    %c0_i32 = arith.constant 0 : i32
    %c0_i32_0 = arith.constant 0 : i32
    %c0_i32_1 = arith.constant 0 : i32
    return %c0_i32, %c0_i32_0 : i32, i32
  }
  func.func @transform_2(%arg0: i32) -> (i32, i32) {
    %c0_i32 = arith.constant 0 : i32
    %c0_i32_0 = arith.constant 0 : i32
    %c0_i32_1 = arith.constant 0 : i32
    return %c0_i32, %c0_i32_0 : i32, i32
  }
  func.func @transform_3(%arg0: i32) -> (i32, i32) {
    %c0_i32 = arith.constant 0 : i32
    %c0_i32_0 = arith.constant 0 : i32
    %c0_i32_1 = arith.constant 0 : i32
    return %c0_i32, %c0_i32_0 : i32, i32
  }
  func.func @transform_4(%arg0: i32) -> (i32, i32) {
    %c0_i32 = arith.constant 0 : i32
    %c0_i32_0 = arith.constant 0 : i32
    %c0_i32_1 = arith.constant 0 : i32
    return %c0_i32, %c0_i32_0 : i32, i32
  }
  func.func @transform_5(%arg0: i32) -> (i32, i32) {
    %c0_i32 = arith.constant 0 : i32
    %c0_i32_0 = arith.constant 0 : i32
    %c0_i32_1 = arith.constant 0 : i32
    return %c0_i32, %c0_i32_0 : i32, i32
  }
  func.func @transform_6(%arg0: i32) -> (i32, i32) {
    %c0_i32 = arith.constant 0 : i32
    %c0_i32_0 = arith.constant 0 : i32
    %c0_i32_1 = arith.constant 0 : i32
    return %c0_i32, %c0_i32_0 : i32, i32
  }
  func.func @transform_7(%arg0: i32) -> (i32, i32, i32) {
    %c0_i32 = arith.constant 0 : i32
    %c0_i32_0 = arith.constant 0 : i32
    %c0_i32_1 = arith.constant 0 : i32
    return %arg0, %c0_i32, %c0_i32_0 : i32, i32, i32
  }
}

</mosaic_0001>

<llo_original>
// kernel: spark_netv3_forward.1
$region0: #{spark_netv3_forward.1}
  #allocation0 [shape = 'u32[]', space=smem, size = 0x4, offset = 0x4, fixed_abs, tag = 'smem constant byte address 0x4 - core index']
  #allocation1 [shape = 'u32[72,128]{1,0:T(1,128)}', space=vmem, size = 0x9000, scoped, tag = 'internal scratch']
  #allocation2 [shape = 'bf16[16,512]{1,0:T(8,128)(2,1)}', space=vmem, size = 0x4000, scoped, tag = 'scratch operand']
  %s0 = inlined_call_operand.vmem [shape: f32[2,16,256], index: 0, kind: input, shape index: {}]
  %s1 = inlined_call_operand.vmem [shape: bf16[16,144], index: 1, kind: input, shape index: {}]
  %s2 = inlined_call_operand.vmem [shape: bf16[16,16], index: 2, kind: input, shape index: {}]
  %s3 = inlined_call_operand.vmem [shape: bf16[16,144], index: 3, kind: input, shape index: {}]
  %s4 = inlined_call_operand.vmem [shape: bf16[16,144], index: 4, kind: input, shape index: {}]
  %s5 = inlined_call_operand.vmem [shape: bf16[16,16], index: 5, kind: input, shape index: {}]
  %s6 = inlined_call_operand.vmem [shape: bf16[16,144], index: 6, kind: input, shape index: {}]
  %s7 = inlined_call_operand.vmem [shape: f32[2,1,256], index: 7, kind: output, shape index: {}]
  %s8 = sld [smem:[#allocation0]]
  $region65: #{spark_netv3_forward.1} parent=0
    _
  %s10 = ssub.s32 1, %s8
  %s11 = scalar_select 0, %s10, %s8
  loop: start=0, step=1, limit=4
  $region2: #{spark_netv3_forward.1} parent=0 // loop_pre_header
    _
  $region3: #{spark_netv3_forward.1} parent=0 // loop_header
    %s13 = sphi 0, %s17
    %p14 = scmp.ge.s32.totalorder %s13, 4
    %s23 = sphi 0, %s25
    %s26 = sphi 0, %s23
    %s27 = sphi 0, %s26
    %s43 = sphi 0, %s27
    %s47 = sphi 0, %s47
    %s49 = sphi 0, %s47
    %s50 = sphi 0, %s49
    %s64 = sphi 0, %s50
    %s68 = sphi 0, %s68
    %s70 = sphi 0, %s68
    %s71 = sphi 0, %s70
    %s85 = sphi 0, %s71
    %s89 = sphi 0, %s89
    %s91 = sphi 0, %s89
    %s92 = sphi 0, %s91
    %s106 = sphi 0, %s92
    %s110 = sphi 0, %s110
    %s112 = sphi 0, %s110
    %s113 = sphi 0, %s112
    %s127 = sphi 0, %s113
    %s131 = sphi 0, %s131
    %s133 = sphi 0, %s131
    %s134 = sphi 0, %s133
    %s148 = sphi 0, %s134
    %s152 = sphi 0, %s152
    %s154 = sphi 0, %s152
    %s155 = sphi 0, %s154
    %s169 = sphi 0, %s155
    %s175 = sphi 0, %s177
    %s178 = sphi 0, %s175
    %s179 = sphi 0, %s178
    %s195 = sphi 0, %s179
  $region4: #{spark_netv3_forward.1} parent=0 // loop_header_branch
    %16 = sbr.rel (%p14) target = $region8
  $region5: #{spark_netv3_forward.1} parent=0 // loop_body
    %s18 = ssub.s32 %s13, 1
    %s19 = ssub.s32 %s13, 2
    %s20 = sadd.s32 %s13, 1
    %s21 = ssub.s32 %s13, %s20
    %p22 = scmp.eq.s32.totalorder %s21, 0
    %s24 = sadd.s32 %s23, 1
    %s25 = scalar_select %p22, %s23, %s24
    %p28 = pneg %p22
    %p29 = scmp.eq.s32.totalorder %s13, 1
    %p30 = por %p28, %p29
    %p31 = scmp.ne.s32.totalorder %s23, %s26
    %p32 = scmp.eq.s32.totalorder %s13, 0
    %p33 = por %p31, %p32
    %p34 = scmp.ne.s32.totalorder %s23, %s26
    %p35 = scmp.eq.s32.totalorder %s18, 1
    %p36 = por %p34, %p35
    %p37 = scmp.ne.s32.totalorder %s26, %s27
    %p38 = scmp.eq.s32.totalorder %s18, 0
    %p39 = por %p37, %p38
    %p40 = scmp.ne.s32.totalorder %s26, %s27
    %p41 = scmp.eq.s32.totalorder %s19, 1
    %p42 = por %p40, %p41
    %p44 = scmp.ne.s32.totalorder %s27, %s43
    %p45 = scmp.eq.s32.totalorder %s19, 0
    %p46 = por %p44, %p45
    %s48 = sadd.s32 %s47, 1
    %p51 = scmp.eq.s32.totalorder %s13, 1
    %p52 = scmp.ne.s32.totalorder %s47, %s49
    %p53 = scmp.eq.s32.totalorder %s13, 0
    %p54 = por %p52, %p53
    %p55 = scmp.ne.s32.totalorder %s47, %s49
    %p56 = scmp.eq.s32.totalorder %s18, 1
    %p57 = por %p55, %p56
    %p58 = scmp.ne.s32.totalorder %s49, %s50
    %p59 = scmp.eq.s32.totalorder %s18, 0
    %p60 = por %p58, %p59
    %p61 = scmp.ne.s32.totalorder %s49, %s50
    %p62 = scmp.eq.s32.totalorder %s19, 1
    %p63 = por %p61, %p62
    %p65 = scmp.ne.s32.totalorder %s50, %s64
    %p66 = scmp.eq.s32.totalorder %s19, 0
    %p67 = por %p65, %p66
    %s69 = sadd.s32 %s68, 1
    %p72 = scmp.eq.s32.totalorder %s13, 1
    %p73 = scmp.ne.s32.totalorder %s68, %s70
    %p74 = scmp.eq.s32.totalorder %s13, 0
    %p75 = por %p73, %p74
    %p76 = scmp.ne.s32.totalorder %s68, %s70
    %p77 = scmp.eq.s32.totalorder %s18, 1
    %p78 = por %p76, %p77
    %p79 = scmp.ne.s32.totalorder %s70, %s71
    %p80 = scmp.eq.s32.totalorder %s18, 0
    %p81 = por %p79, %p80
    %p82 = scmp.ne.s32.totalorder %s70, %s71
    %p83 = scmp.eq.s32.totalorder %s19, 1
    %p84 = por %p82, %p83
    %p86 = scmp.ne.s32.totalorder %s71, %s85
    %p87 = scmp.eq.s32.totalorder %s19, 0
    %p88 = por %p86, %p87
    %s90 = sadd.s32 %s89, 1
    %p93 = scmp.eq.s32.totalorder %s13, 1
    %p94 = scmp.ne.s32.totalorder %s89, %s91
    %p95 = scmp.eq.s32.totalorder %s13, 0
    %p96 = por %p94, %p95
    %p97 = scmp.ne.s32.totalorder %s89, %s91
    %p98 = scmp.eq.s32.totalorder %s18, 1
    %p99 = por %p97, %p98
    %p100 = scmp.ne.s32.totalorder %s91, %s92
    %p101 = scmp.eq.s32.totalorder %s18, 0
    %p102 = por %p100, %p101
    %p103 = scmp.ne.s32.totalorder %s91, %s92
    %p104 = scmp.eq.s32.totalorder %s19, 1
    %p105 = por %p103, %p104
    %p107 = scmp.ne.s32.totalorder %s92, %s106
    %p108 = scmp.eq.s32.totalorder %s19, 0
    %p109 = por %p107, %p108
    %s111 = sadd.s32 %s110, 1
    %p114 = scmp.eq.s32.totalorder %s13, 1
    %p115 = scmp.ne.s32.totalorder %s110, %s112
    %p116 = scmp.eq.s32.totalorder %s13, 0
    %p117 = por %p115, %p116
    %p118 = scmp.ne.s32.totalorder %s110, %s112
    %p119 = scmp.eq.s32.totalorder %s18, 1
    %p120 = por %p118, %p119
    %p121 = scmp.ne.s32.totalorder %s112, %s113
    %p122 = scmp.eq.s32.totalorder %s18, 0
    %p123 = por %p121, %p122
    %p124 = scmp.ne.s32.totalorder %s112, %s113
    %p125 = scmp.eq.s32.totalorder %s19, 1
    %p126 = por %p124, %p125
    %p128 = scmp.ne.s32.totalorder %s113, %s127
    %p129 = scmp.eq.s32.totalorder %s19, 0
    %p130 = por %p128, %p129
    %s132 = sadd.s32 %s131, 1
    %p135 = scmp.eq.s32.totalorder %s13, 1
    %p136 = scmp.ne.s32.totalorder %s131, %s133
    %p137 = scmp.eq.s32.totalorder %s13, 0
    %p138 = por %p136, %p137
    %p139 = scmp.ne.s32.totalorder %s131, %s133
    %p140 = scmp.eq.s32.totalorder %s18, 1
    %p141 = por %p139, %p140
    %p142 = scmp.ne.s32.totalorder %s133, %s134
    %p143 = scmp.eq.s32.totalorder %s18, 0
    %p144 = por %p142, %p143
    %p145 = scmp.ne.s32.totalorder %s133, %s134
    %p146 = scmp.eq.s32.totalorder %s19, 1
    %p147 = por %p145, %p146
    %p149 = scmp.ne.s32.totalorder %s134, %s148
    %p150 = scmp.eq.s32.totalorder %s19, 0
    %p151 = por %p149, %p150
    %s153 = sadd.s32 %s152, 1
    %p156 = scmp.eq.s32.totalorder %s13, 1
    %p157 = scmp.ne.s32.totalorder %s152, %s154
    %p158 = scmp.eq.s32.totalorder %s13, 0
    %p159 = por %p157, %p158
    %p160 = scmp.ne.s32.totalorder %s152, %s154
    %p161 = scmp.eq.s32.totalorder %s18, 1
    %p162 = por %p160, %p161
    %p163 = scmp.ne.s32.totalorder %s154, %s155
    %p164 = scmp.eq.s32.totalorder %s18, 0
    %p165 = por %p163, %p164
    %p166 = scmp.ne.s32.totalorder %s154, %s155
    %p167 = scmp.eq.s32.totalorder %s19, 1
    %p168 = por %p166, %p167
    %p170 = scmp.ne.s32.totalorder %s155, %s169
    %p171 = scmp.eq.s32.totalorder %s19, 0
    %p172 = por %p170, %p171
    %s173 = ssub.s32 %s13, %s20
    %p174 = scmp.eq.s32.totalorder %s173, 0
    %s176 = sadd.s32 %s175, 1
    %s177 = scalar_select %p174, %s175, %s176
    %p180 = pneg %p174
    %p181 = scmp.eq.s32.totalorder %s13, 1
    %p182 = por %p180, %p181
    %p183 = scmp.ne.s32.totalorder %s175, %s178
    %p184 = scmp.eq.s32.totalorder %s13, 0
    %p185 = por %p183, %p184
    %p186 = scmp.ne.s32.totalorder %s175, %s178
    %p187 = scmp.eq.s32.totalorder %s18, 1
    %p188 = por %p186, %p187
    %p189 = scmp.ne.s32.totalorder %s178, %s179
    %p190 = scmp.eq.s32.totalorder %s18, 0
    %p191 = por %p189, %p190
    %p192 = scmp.ne.s32.totalorder %s178, %s179
    %p193 = scmp.eq.s32.totalorder %s19, 1
    %p194 = por %p192, %p193
    %p196 = scmp.ne.s32.totalorder %s179, %s195
    %p197 = scmp.eq.s32.totalorder %s19, 0
    %p198 = por %p196, %p197
    %p199 = scmp.le.s32.totalorder 1, %s13
    %p200 = scmp.lt.s32.totalorder %s13, 3
    %p201 = pnand %p199, %p200
    %p202 = pneg %p201
    // Predicated region
    $region9: #{spark_netv3_forward.1} parent=5 // pred_check
      _
    $region10: #{spark_netv3_forward.1} parent=5 // pred_check_branch
      %204 = sbr.rel (%p201) target = $region12
    $region11: #{spark_netv3_forward.1} parent=5 // pred_region
      %s205 = ssub.s32 %s13, 1
      // Predicated region
      $region13: #{spark_netv3_forward.1} parent=11 // pred_check
        %p206 = pneg %p60
      $region14: #{spark_netv3_forward.1} parent=11 // pred_check_branch
        %208 = sbr.rel (%p206) target = $region16
      $region15: #{spark_netv3_forward.1} parent=11 // pred_region
        _
      $region16: #{spark_netv3_forward.1} parent=11 // pred_fallthru
        _
      // Predicated region
      $region17: #{spark_netv3_forward.1} parent=11 // pred_check
        %p209 = pneg %p81
      $region18: #{spark_netv3_forward.1} parent=11 // pred_check_branch
        %211 = sbr.rel (%p209) target = $region20
      $region19: #{spark_netv3_forward.1} parent=11 // pred_region
        _
      $region20: #{spark_netv3_forward.1} parent=11 // pred_fallthru
        _
      // Predicated region
      $region21: #{spark_netv3_forward.1} parent=11 // pred_check
        %p212 = pneg %p102
      $region22: #{spark_netv3_forward.1} parent=11 // pred_check_branch
        %214 = sbr.rel (%p212) target = $region24
      $region23: #{spark_netv3_forward.1} parent=11 // pred_region
        _
      $region24: #{spark_netv3_forward.1} parent=11 // pred_fallthru
        _
      // Predicated region
      $region25: #{spark_netv3_forward.1} parent=11 // pred_check
        %p215 = pneg %p123
      $region26: #{spark_netv3_forward.1} parent=11 // pred_check_branch
        %217 = sbr.rel (%p215) target = $region28
      $region27: #{spark_netv3_forward.1} parent=11 // pred_region
        _
      $region28: #{spark_netv3_forward.1} parent=11 // pred_fallthru
        _
      // Predicated region
      $region29: #{spark_netv3_forward.1} parent=11 // pred_check
        %p218 = pneg %p144
      $region30: #{spark_netv3_forward.1} parent=11 // pred_check_branch
        %220 = sbr.rel (%p218) target = $region32
      $region31: #{spark_netv3_forward.1} parent=11 // pred_region
        _
      $region32: #{spark_netv3_forward.1} parent=11 // pred_fallthru
        _
      // Predicated region
      $region33: #{spark_netv3_forward.1} parent=11 // pred_check
        %p221 = pneg %p165
      $region34: #{spark_netv3_forward.1} parent=11 // pred_check_branch
        %223 = sbr.rel (%p221) target = $region36
      $region35: #{spark_netv3_forward.1} parent=11 // pred_region
        _
      $region36: #{spark_netv3_forward.1} parent=11 // pred_fallthru
        _
    $region12: #{spark_netv3_forward.1} parent=5 // pred_fallthru
      _
    %p224 = scmp.lt.s32.totalorder %s13, 2
    // Predicated region
    $region37: #{spark_netv3_forward.1} parent=5 // pred_check
      %p225 = pneg %p224
    $region38: #{spark_netv3_forward.1} parent=5 // pred_check_branch
      %227 = sbr.rel (%p225) target = $region40
    $region39: #{spark_netv3_forward.1} parent=5 // pred_region
      // Predicated region
      $region41: #{spark_netv3_forward.1} parent=39 // pred_check
        %p228 = pneg %p33
      $region42: #{spark_netv3_forward.1} parent=39 // pred_check_branch
        %230 = sbr.rel (%p228) target = $region44
      $region43: #{spark_netv3_forward.1} parent=39 // pred_region
        %p231 = scmp.lt.s32.totalorder %s13, 1
        %s232 = scalar_select %p231, %s13, 1
        %s233 = smul.addr %s232, 4
        %s234 = smul.addr %s233, 8
        %s235 = scalar_lea.vmem %s0, %s234
      $region44: #{spark_netv3_forward.1} parent=39 // pred_fallthru
        _
    $region40: #{spark_netv3_forward.1} parent=5 // pred_fallthru
      _
    %p236 = scmp.le.s32.totalorder 1, %s13
    %p237 = scmp.lt.s32.totalorder %s13, 3
    %p238 = pnand %p236, %p237
    %p239 = pneg %p238
    // Predicated region
    $region45: #{spark_netv3_forward.1} parent=5 // pred_check
      _
    $region46: #{spark_netv3_forward.1} parent=5 // pred_check_branch
      %241 = sbr.rel (%p238) target = $region48
    $region47: #{spark_netv3_forward.1} parent=5 // pred_region
      %s242 = ssub.s32 %s13, 1
      %p243 = scmp.lt.s32.totalorder %s18, 1
      %s244 = scalar_select %p243, %s18, 1
      %s245 = smul.addr %s244, 4
      %s246 = smul.addr %s245, 8
      %s247 = scalar_lea.vmem %s0, %s246
      %p248 = pneg %p39
      %p249 = pneg %p36
      %p250 = pneg %p60
      %p251 = pneg %p57
      %p252 = pneg %p81
      %p253 = pneg %p78
      %p254 = pneg %p102
      %p255 = pneg %p99
      %p256 = pneg %p123
      %p257 = pneg %p120
      %p258 = pneg %p144
      %p259 = pneg %p141
      %p260 = pneg %p165
      %p261 = pneg %p162
      %p262 = pneg %p191
      %p263 = pneg %p188
      %p264 = scmp.lt.s32.totalorder %s18, 1
      %s265 = scalar_select %p264, %s18, 1
      %s266 = smul.addr %s265, 2
      %s267 = scalar_lea.vmem %s7, %s266
      %p268 = scmp.lt.s32.totalorder %s18, 1
      %s269 = scalar_select %p268, %s18, 1
      %s270 = smul.addr %s269, 4
      %s271 = smul.addr %s270, 8
      %s272 = scalar_lea.vmem %s0, %s271
      %p273 = scmp.lt.s32.totalorder %s18, 1
      %s274 = scalar_select %p273, %s18, 1
      %s275 = smul.addr %s274, 2
      %s276 = scalar_lea.vmem %s7, %s275
      %p280 = scmp.eq.s32.totalorder %s18, 0
      // Predicated region
      $region49: #{spark_netv3_forward.1} parent=47 // pred_check
        %p281 = pneg %p280
      $region50: #{spark_netv3_forward.1} parent=47 // pred_check_branch
        %283 = sbr.rel (%p281) target = $region52
      $region51: #{spark_netv3_forward.1} parent=47 // pred_region
        %284 = vst [vmem:[#allocation2] sm:$0xff] 0
        %285 = vst [vmem:[#allocation2 + $0x8] sm:$0xff] 0
        %286 = vst [vmem:[#allocation2 + $0x10] sm:$0xff] 0
        %287 = vst [vmem:[#allocation2 + $0x18] sm:$0xff] 0
      $region52: #{spark_netv3_forward.1} parent=47 // pred_fallthru
        _
      %v288 = vlaneseq
      %v289 = vand.u32 %v288, 127
      %v290 = vadd.s32 %v289, 128
      %vm291 = vcmp.lt.s32.totalorder %v289, 0
      %v292 = vsub.s32 0, %v289
      %v293 = vsel %vm291, %v292, %v289
      %v294 = vshrl.u32 %v293, 4
      %v295 = vand.u32 %v293, 15
      %v296 = vsub.s32 0, %v295
      %v297 = vsel %vm291, %v296, %v295
      %vm298 = vcmp.lt.s32.totalorder %v290, 0
      %v299 = vsub.s32 0, %v290
      %v300 = vsel %vm298, %v299, %v290
      %v301 = vshrl.u32 %v300, 4
      %v302 = vand.u32 %v300, 15
      %v303 = vsub.s32 0, %v302
      %v304 = vsel %vm298, %v303, %v302
      %vm305 = vcmp.ne.s32.totalorder %v297, 0
      %vm306 = vcmp.ne.s32.totalorder %v304, 0
      %vm307 = vcmp.lt.s32.totalorder %v297, 0
      %vm308 = vcmp.lt.s32.totalorder %v304, 0
      %vm309 = vmand %vm307, %vm305
      %vm310 = vmand %vm308, %vm306
      %v311 = vadd.s32 %v297, 16
      %v312 = vadd.s32 %v304, 16
      %v313 = vsel %vm309, %v311, %v297
      %v314 = vsel %vm310, %v312, %v304
      %vm315 = vcmp.ne.s32.totalorder %v313, 0
      %vm316 = vcmp.ne.s32.totalorder %v314, 0
      %vm317 = vcmp.ne.s32.totalorder %v313, 15
      %vm318 = vcmp.ne.s32.totalorder %v314, 15
      %v319 = vld [vmem:[%s272] sm:$0xff]
      %v320 = vld [vmem:[%s272 + $0x8] sm:$0xff]
      %v321 = vld [vmem:[%s272 + $0x10] sm:$0xff]
      %v322 = vld [vmem:[%s272 + $0x18] sm:$0xff]
      %v323 = vpack.c.bf16 %v320, %v319
      %v324 = vpack.c.bf16 %v322, %v321
      %325 = vst [vmem:[#allocation2 + $0x4] sm:$0xff] %v323
      %326 = vst [vmem:[#allocation2 + $0x14] sm:$0xff] %v324
      %v327 = vld [vmem:[#allocation2] sm:$0xff]
      %v328 = vld [vmem:[#allocation2 + $0x8] sm:$0xf]
      %v329 = vld [vmem:[#allocation2 + $0x10] sm:$0xff]
      %v330 = vld [vmem:[#allocation2 + $0x18] sm:$0xf]
      %v331 = vsel %vm315, 1, 0
      %v332 = vsel %vm316, 1, 0
      %vm333 = vcmp.eq.s32.totalorder %v331, 1
      %vm334 = vcmp.eq.s32.totalorder %v332, 1
      %vm335 = vmpackc.low %vm334, %vm333
      %v336 = vsel %vm335, 65537, 0
      %337 = vrot.lane.b32.xlu0 %v336, 111
      %v338 = vpop.permute.xlu0 %337
      %v339 = vrot.slane %v338, 4
      %vm340 = vcmask 908288
      %v341 = vsel %vm340, %v339, %v338
      %v342 = vunpack.c.l.b16 %v341
      %v343 = vunpack.c.h.b16 %v341
      %v344 = vunpack.c.l.b16 0
      %v345 = vunpack.c.h.b16 0
      %vm346 = vcmp.ne.s32.totalorder %v342, %v344
      %vm347 = vcmp.ne.s32.totalorder %v343, %v345
      %vm348 = vmpackc.low %vm347, %vm346
      %v349 = vunpack.c.l.b16 %v339
      %v350 = vunpack.c.h.b16 %v339
      %v351 = vunpack.c.l.b16 0
      %v352 = vunpack.c.h.b16 0
      %vm353 = vcmp.ne.s32.totalorder %v349, %v351
      %vm354 = vcmp.ne.s32.totalorder %v350, %v352
      %vm355 = vmpackc.low %vm354, %vm353
      %v356 = vsel %vm348, %v327, 0
      %v357 = vsel %vm355, %v328, 0
      %v358 = vsel %vm348, %v329, 0
      %v359 = vsel %vm355, %v330, 0
      %v360 = vsel %vm317, 1, 0
      %v361 = vsel %vm318, 1, 0
      %vm362 = vcmp.eq.s32.totalorder %v360, 1
      %vm363 = vcmp.eq.s32.totalorder %v361, 1
      %vm364 = vmpackc.low %vm363, %vm362
      %v365 = vsel %vm364, 65537, 0
      %366 = vrot.lane.b32.xlu0 %v365, 113
      %v367 = vpop.permute.xlu0 %366
      %v368 = vrot.slane %v367, 4
      %vm369 = vcmask 924672
      %v370 = vsel %vm369, %v368, %v367
      %v371 = vunpack.c.l.b16 %v370
      %v372 = vunpack.c.h.b16 %v370
      %v373 = vunpack.c.l.b16 0
      %v374 = vunpack.c.h.b16 0
      %vm375 = vcmp.ne.s32.totalorder %v371, %v373
      %vm376 = vcmp.ne.s32.totalorder %v372, %v374
      %vm377 = vmpackc.low %vm376, %vm375
      %v378 = vunpack.c.l.b16 %v368
      %v379 = vunpack.c.h.b16 %v368
      %v380 = vunpack.c.l.b16 0
      %v381 = vunpack.c.h.b16 0
      %vm382 = vcmp.ne.s32.totalorder %v378, %v380
      %vm383 = vcmp.ne.s32.totalorder %v379, %v381
      %vm384 = vmpackc.low %vm383, %vm382
      %v385 = vsel %vm377, %v327, 0
      %v386 = vsel %vm384, %v328, 0
      %v387 = vsel %vm377, %v329, 0
      %v388 = vsel %vm384, %v330, 0
      %389 = vrot.lane.b32.xlu0 %v336, 127
      %v390 = vpop.permute.xlu0 %389
      %v391 = vrot.slane %v390, 4
      %vm392 = vcmask 1039360
      %v393 = vsel %vm392, %v391, %v390
      %v394 = vunpack.c.l.b16 %v393
      %v395 = vunpack.c.h.b16 %v393
      %v396 = vunpack.c.l.b16 0
      %v397 = vunpack.c.h.b16 0
      %vm398 = vcmp.ne.s32.totalorder %v394, %v396
      %vm399 = vcmp.ne.s32.totalorder %v395, %v397
      %vm400 = vmpackc.low %vm399, %vm398
      %v401 = vunpack.c.l.b16 %v391
      %v402 = vunpack.c.h.b16 %v391
      %v403 = vunpack.c.l.b16 0
      %v404 = vunpack.c.h.b16 0
      %vm405 = vcmp.ne.s32.totalorder %v401, %v403
      %vm406 = vcmp.ne.s32.totalorder %v402, %v404
      %vm407 = vmpackc.low %vm406, %vm405
      %v408 = vsel %vm400, %v327, 0
      %v409 = vsel %vm407, %v328, 0
      %v410 = vsel %vm400, %v329, 0
      %v411 = vsel %vm407, %v330, 0
      %v412 = vld [vmem:[#allocation2 + $0x4] sm:$0xff]
      %v413 = vld [vmem:[#allocation2 + $0xc] sm:$0xf]
      %v414 = vld [vmem:[#allocation2 + $0x14] sm:$0xff]
      %v415 = vld [vmem:[#allocation2 + $0x1c] sm:$0xf]
      %416 = vrot.lane.b32.xlu0 %v365, 1
      %v417 = vpop.permute.xlu0 %416
      %v418 = vrot.slane %v417, 4
      %vm419 = vcmask 7168
      %v420 = vsel %vm419, %v418, %v417
      %v421 = vunpack.c.l.b16 %v420
      %v422 = vunpack.c.h.b16 %v420
      %v423 = vunpack.c.l.b16 0
      %v424 = vunpack.c.h.b16 0
      %vm425 = vcmp.ne.s32.totalorder %v421, %v423
      %vm426 = vcmp.ne.s32.totalorder %v422, %v424
      %vm427 = vmpackc.low %vm426, %vm425
      %v428 = vunpack.c.l.b16 %v418
      %v429 = vunpack.c.h.b16 %v418
      %v430 = vunpack.c.l.b16 0
      %v431 = vunpack.c.h.b16 0
      %vm432 = vcmp.ne.s32.totalorder %v428, %v430
      %vm433 = vcmp.ne.s32.totalorder %v429, %v431
      %vm434 = vmpackc.low %vm433, %vm432
      %v435 = vsel %vm427, %v412, 0
      %v436 = vsel %vm434, %v413, 0
      %v437 = vsel %vm427, %v414, 0
      %v438 = vsel %vm434, %v415, 0
      %439 = vrot.lane.b32.xlu0 %v336, 15
      %v440 = vpop.permute.xlu0 %439
      %v441 = vrot.slane %v440, 4
      %vm442 = vcmask 121856
      %v443 = vsel %vm442, %v441, %v440
      %v444 = vunpack.c.l.b16 %v443
      %v445 = vunpack.c.h.b16 %v443
      %v446 = vunpack.c.l.b16 0
      %v447 = vunpack.c.h.b16 0
      %vm448 = vcmp.ne.s32.totalorder %v444, %v446
      %vm449 = vcmp.ne.s32.totalorder %v445, %v447
      %vm450 = vmpackc.low %vm449, %vm448
      %v451 = vunpack.c.l.b16 %v441
      %v452 = vunpack.c.h.b16 %v441
      %v453 = vunpack.c.l.b16 0
      %v454 = vunpack.c.h.b16 0
      %vm455 = vcmp.ne.s32.totalorder %v451, %v453
      %vm456 = vcmp.ne.s32.totalorder %v452, %v454
      %vm457 = vmpackc.low %vm456, %vm455
      %v458 = vsel %vm450, %v412, 0
      %v459 = vsel %vm457, %v413, 0
      %v460 = vsel %vm450, %v414, 0
      %v461 = vsel %vm457, %v415, 0
      %462 = vrot.lane.b32.xlu0 %v365, 17
      %v463 = vpop.permute.xlu0 %462
      %v464 = vrot.slane %v463, 4
      %vm465 = vcmask 138240
      %v466 = vsel %vm465, %v464, %v463
      %v467 = vunpack.c.l.b16 %v466
      %v468 = vunpack.c.h.b16 %v466
      %v469 = vunpack.c.l.b16 0
      %v470 = vunpack.c.h.b16 0
      %vm471 = vcmp.ne.s32.totalorder %v467, %v469
      %vm472 = vcmp.ne.s32.totalorder %v468, %v470
      %vm473 = vmpackc.low %vm472, %vm471
      %v474 = vunpack.c.l.b16 %v464
      %v475 = vunpack.c.h.b16 %v464
      %v476 = vunpack.c.l.b16 0
      %v477 = vunpack.c.h.b16 0
      %vm478 = vcmp.ne.s32.totalorder %v474, %v476
      %vm479 = vcmp.ne.s32.totalorder %v475, %v477
      %vm480 = vmpackc.low %vm479, %vm478
      %v481 = vsel %vm473, %v412, 0
      %v482 = vsel %vm480, %v413, 0
      %v483 = vsel %vm473, %v414, 0
      %v484 = vsel %vm480, %v415, 0
      %v489 = vunpack.c.l.b16 %v356
      %v490 = vunpack.c.h.b16 %v356
      %v491 = vunpack.c.l.b16 %v357
      %v492 = vunpack.c.l.b16 %v358
      %v493 = vunpack.c.h.b16 %v358
      %v494 = vunpack.c.l.b16 %v359
      %v495 = vpack.c.b16 %v492, %v489
      %v496 = vpack.c.b16 %v493, %v490
      %v497 = vpack.c.b16 %v494, %v491
      %v502 = vunpack.c.l.b16 %v327
      %v503 = vunpack.c.h.b16 %v327
      %v504 = vunpack.c.l.b16 %v328
      %v505 = vunpack.c.l.b16 %v329
      %v506 = vunpack.c.h.b16 %v329
      %v507 = vunpack.c.l.b16 %v330
      %v508 = vpack.c.b16 %v505, %v502
      %v509 = vpack.c.b16 %v506, %v503
      %v510 = vpack.c.b16 %v507, %v504
      %511 = vrot.lane.b32.xlu0 %v508, 127
      %v512 = vpop.permute.xlu0 %511
      %513 = vrot.lane.b32.xlu0 %v509, 127
      %v514 = vpop.permute.xlu0 %513
      %515 = vrot.lane.b32.xlu0 %v510, 127
      %v516 = vpop.permute.xlu0 %515
      %v517 = vsel %vm392, %v512, %v514
      %v518 = vsel %vm392, %v514, %v516
      %v523 = vunpack.c.l.b16 %v385
      %v524 = vunpack.c.h.b16 %v385
      %v525 = vunpack.c.l.b16 %v386
      %v526 = vunpack.c.l.b16 %v387
      %v527 = vunpack.c.h.b16 %v387
      %v528 = vunpack.c.l.b16 %v388
      %v529 = vpack.c.b16 %v526, %v523
      %v530 = vpack.c.b16 %v527, %v524
      %v531 = vpack.c.b16 %v528, %v525
      %532 = vrot.lane.b32.xlu0 %v529, 126
      %v533 = vpop.permute.xlu0 %532
      %534 = vrot.lane.b32.xlu0 %v530, 126
      %v535 = vpop.permute.xlu0 %534
      %536 = vrot.lane.b32.xlu0 %v531, 126
      %v537 = vpop.permute.xlu0 %536
      %vm538 = vcmask 1031168
      %v539 = vsel %vm538, %v533, %v535
      %v540 = vsel %vm538, %v535, %v537
      %v545 = vunpack.c.l.b16 %v408
      %v546 = vunpack.c.h.b16 %v408
      %v547 = vunpack.c.l.b16 %v409
      %v548 = vunpack.c.l.b16 %v410
      %v549 = vunpack.c.h.b16 %v410
      %v550 = vunpack.c.l.b16 %v411
      %v551 = vpack.c.b16 %v548, %v545
      %v552 = vpack.c.b16 %v549, %v546
      %v553 = vpack.c.b16 %v550, %v547
      %554 = vrot.lane.b32.xlu0 %v551, 112
      %v555 = vpop.permute.xlu0 %554
      %556 = vrot.lane.b32.xlu0 %v552, 112
      %v557 = vpop.permute.xlu0 %556
      %558 = vrot.lane.b32.xlu0 %v553, 112
      %v559 = vpop.permute.xlu0 %558
      %vm560 = vcmask 916480
      %v561 = vsel %vm560, %v555, %v557
      %v562 = vsel %vm560, %v557, %v559
      %v565 = vunpack.c.l.b16 %v323
      %v566 = vunpack.c.h.b16 %v323
      %v567 = vunpack.c.l.b16 %v324
      %v568 = vunpack.c.h.b16 %v324
      %v569 = vpack.c.b16 %v567, %v565
      %v570 = vpack.c.b16 %v568, %v566
      %571 = vrot.lane.b32.xlu0 %v569, 111
      %v572 = vpop.permute.xlu0 %571
      %573 = vrot.lane.b32.xlu0 %v570, 111
      %v574 = vpop.permute.xlu0 %573
      %v575 = vsel %vm340, %v572, %v574
      %v580 = vunpack.c.l.b16 %v435
      %v581 = vunpack.c.h.b16 %v435
      %v582 = vunpack.c.l.b16 %v436
      %v583 = vunpack.c.l.b16 %v437
      %v584 = vunpack.c.h.b16 %v437
      %v585 = vunpack.c.l.b16 %v438
      %v586 = vpack.c.b16 %v583, %v580
      %v587 = vpack.c.b16 %v584, %v581
      %v588 = vpack.c.b16 %v585, %v582
      %589 = vrot.lane.b32.xlu0 %v586, 110
      %v590 = vpop.permute.xlu0 %589
      %591 = vrot.lane.b32.xlu0 %v587, 110
      %v592 = vpop.permute.xlu0 %591
      %593 = vrot.lane.b32.xlu0 %v588, 110
      %v594 = vpop.permute.xlu0 %593
      %vm595 = vcmask 900096
      %v596 = vsel %vm595, %v590, %v592
      %v597 = vsel %vm595, %v592, %v594
      %v602 = vunpack.c.l.b16 %v458
      %v603 = vunpack.c.h.b16 %v458
      %v604 = vunpack.c.l.b16 %v459
      %v605 = vunpack.c.l.b16 %v460
      %v606 = vunpack.c.h.b16 %v460
      %v607 = vunpack.c.l.b16 %v461
      %v608 = vpack.c.b16 %v605, %v602
      %v609 = vpack.c.b16 %v606, %v603
      %v610 = vpack.c.b16 %v607, %v604
      %611 = vrot.lane.b32.xlu0 %v608, 96
      %v612 = vpop.permute.xlu0 %611
      %613 = vrot.lane.b32.xlu0 %v609, 96
      %v614 = vpop.permute.xlu0 %613
      %615 = vrot.lane.b32.xlu0 %v610, 96
      %v616 = vpop.permute.xlu0 %615
      %vm617 = vcmask 785408
      %v618 = vsel %vm617, %v612, %v614
      %v619 = vsel %vm617, %v614, %v616
      %v624 = vunpack.c.l.b16 %v412
      %v625 = vunpack.c.h.b16 %v412
      %v626 = vunpack.c.l.b16 %v413
      %v627 = vunpack.c.l.b16 %v414
      %v628 = vunpack.c.h.b16 %v414
      %v629 = vunpack.c.l.b16 %v415
      %v630 = vpack.c.b16 %v627, %v624
      %v631 = vpack.c.b16 %v628, %v625
      %v632 = vpack.c.b16 %v629, %v626
      %633 = vrot.lane.b32.xlu0 %v630, 95
      %v634 = vpop.permute.xlu0 %633
      %635 = vrot.lane.b32.xlu0 %v631, 95
      %v636 = vpop.permute.xlu0 %635
      %637 = vrot.lane.b32.xlu0 %v632, 95
      %v638 = vpop.permute.xlu0 %637
      %vm639 = vcmask 777216
      %v640 = vsel %vm639, %v634, %v636
      %v641 = vsel %vm639, %v636, %v638
      %v646 = vunpack.c.l.b16 %v481
      %v647 = vunpack.c.h.b16 %v481
      %v648 = vunpack.c.l.b16 %v482
      %v649 = vunpack.c.l.b16 %v483
      %v650 = vunpack.c.h.b16 %v483
      %v651 = vunpack.c.l.b16 %v484
      %v652 = vpack.c.b16 %v649, %v646
      %v653 = vpack.c.b16 %v650, %v647
      %v654 = vpack.c.b16 %v651, %v648
      %655 = vrot.lane.b32.xlu0 %v652, 94
      %v656 = vpop.permute.xlu0 %655
      %657 = vrot.lane.b32.xlu0 %v653, 94
      %v658 = vpop.permute.xlu0 %657
      %659 = vrot.lane.b32.xlu0 %v654, 94
      %v660 = vpop.permute.xlu0 %659
      %vm661 = vcmask 769024
      %v662 = vsel %vm661, %v656, %v658
      %v663 = vsel %vm661, %v658, %v660
      %v664 = vld [vmem:[%s1] sm:$0xff]
      %v665 = vld [vmem:[%s1 + $0x8] sm:$0xff]
      %v668 = vunpack.c.l.b16 %v664
      %v669 = vunpack.c.h.b16 %v664
      %v670 = vunpack.c.l.b16 %v665
      %v671 = vunpack.c.h.b16 %v665
      %v672 = vpack.c.b16 %v670, %v668
      %v673 = vpack.c.b16 %v671, %v669
      %675 = vrot.lane.b32.xlu0 %v495, 17
      %v676 = vpop.permute.xlu0 %675
      %677 = vrot.lane.b32.xlu0 %v496, 17
      %v678 = vpop.permute.xlu0 %677
      %679 = vrot.lane.b32.xlu0 %v497, 17
      %v680 = vpop.permute.xlu0 %679
      %681 = vrot.lane.b32.xlu0 %v517, 17
      %v682 = vpop.permute.xlu0 %681
      %683 = vrot.lane.b32.xlu0 %v518, 17
      %v684 = vpop.permute.xlu0 %683
      %685 = vrot.lane.b32.xlu0 %v516, 17
      %v686 = vpop.permute.xlu0 %685
      %687 = vrot.lane.b32.xlu0 %v539, 17
      %v688 = vpop.permute.xlu0 %687
      %689 = vrot.lane.b32.xlu0 %v540, 17
      %v690 = vpop.permute.xlu0 %689
      %691 = vrot.lane.b32.xlu0 %v537, 17
      %v692 = vpop.permute.xlu0 %691
      %693 = vrot.lane.b32.xlu0 %v561, 17
      %v694 = vpop.permute.xlu0 %693
      %695 = vrot.lane.b32.xlu0 %v562, 17
      %v696 = vpop.permute.xlu0 %695
      %697 = vrot.lane.b32.xlu0 %v559, 17
      %v698 = vpop.permute.xlu0 %697
      %699 = vrot.lane.b32.xlu0 %v572, 17
      %v700 = vpop.permute.xlu0 %699
      %701 = vrot.lane.b32.xlu0 %v575, 17
      %v702 = vpop.permute.xlu0 %701
      %703 = vrot.lane.b32.xlu0 %v574, 17
      %v704 = vpop.permute.xlu0 %703
      %705 = vrot.lane.b32.xlu0 %v590, 17
      %v706 = vpop.permute.xlu0 %705
      %707 = vrot.lane.b32.xlu0 %v596, 17
      %v708 = vpop.permute.xlu0 %707
      %709 = vrot.lane.b32.xlu0 %v597, 17
      %v710 = vpop.permute.xlu0 %709
      %711 = vrot.lane.b32.xlu0 %v612, 17
      %v712 = vpop.permute.xlu0 %711
      %713 = vrot.lane.b32.xlu0 %v618, 17
      %v714 = vpop.permute.xlu0 %713
      %715 = vrot.lane.b32.xlu0 %v619, 17
      %v716 = vpop.permute.xlu0 %715
      %717 = vrot.lane.b32.xlu0 %v634, 17
      %v718 = vpop.permute.xlu0 %717
      %719 = vrot.lane.b32.xlu0 %v640, 17
      %v720 = vpop.permute.xlu0 %719
      %721 = vrot.lane.b32.xlu0 %v641, 17
      %v722 = vpop.permute.xlu0 %721
      %723 = vrot.lane.b32.xlu0 %v656, 17
      %v724 = vpop.permute.xlu0 %723
      %725 = vrot.lane.b32.xlu0 %v662, 17
      %v726 = vpop.permute.xlu0 %725
      %727 = vrot.lane.b32.xlu0 %v663, 17
      %v728 = vpop.permute.xlu0 %727
      %v729 = vsel %vm465, %v676, %v678
      %v730 = vsel %vm465, %v678, %v680
      %v731 = vsel %vm465, %v682, %v684
      %v732 = vsel %vm465, %v684, %v686
      %v733 = vsel %vm465, %v688, %v690
      %v734 = vsel %vm465, %v690, %v692
      %v735 = vsel %vm465, %v694, %v696
      %v736 = vsel %vm465, %v696, %v698
      %v737 = vsel %vm465, %v700, %v702
      %v738 = vsel %vm465, %v702, %v704
      %v739 = vsel %vm465, %v706, %v708
      %v740 = vsel %vm465, %v708, %v710
      %v741 = vsel %vm465, %v712, %v714
      %v742 = vsel %vm465, %v714, %v716
      %v743 = vsel %vm465, %v718, %v720
      %v744 = vsel %vm465, %v720, %v722
      %v745 = vsel %vm465, %v724, %v726
      %v746 = vsel %vm465, %v726, %v728
      %vm765 = vcmask 130048
      %v767 = vsel %vm765, %v673, 0
      %769 = vmatpush.bf16.msra.mxu0 %v743
      %770 = vmatpush.bf16.msra.mxu0 %v741
      %771 = vmatpush.bf16.msra.mxu0 %v739
      %772 = vmatpush.bf16.msra.mxu0 %v737
      %773 = vmatpush.bf16.msra.mxu0 %v735
      %774 = vmatpush.bf16.msra.mxu0 %v733
      %775 = vmatpush.bf16.msra.mxu0 %v731
      %776 = vmatpush.bf16.msra.mxu0 %v729
      %777 = vmatmul.bf16.gmra.mxu0 %v672
      %v778 = vpop.f32.mrf.mxu0
      %v779 = vadd.f32 0.0, %v778
      %v780 = vpop.f32.mrf.mxu0
      %v781 = vadd.f32 0.0, %v780
      %782 = vdwg.mxu0
      %783 = vmatpush.bf16.msra.mxu0 0
      %784 = vmatpush.bf16.msra.mxu0 0
      %785 = vmatpush.bf16.msra.mxu0 0
      %786 = vmatpush.bf16.msra.mxu0 0
      %787 = vmatpush.bf16.msra.mxu0 0
      %788 = vmatpush.bf16.msra.mxu0 0
      %789 = vmatpush.bf16.msra.mxu0 0
      %790 = vmatpush.bf16.msra.mxu0 %v745
      %791 = vmatmul.bf16.gmra.mxu0 %v767
      %v792 = vpop.f32.mrf.mxu0
      %v793 = vadd.f32 %v779, %v792
      %v794 = vpop.f32.mrf.mxu0
      %v795 = vadd.f32 %v781, %v794
      %796 = vdwg.mxu0
      %797 = vmatpush.bf16.msra.mxu0 %v744
      %798 = vmatpush.bf16.msra.mxu0 %v742
      %799 = vmatpush.bf16.msra.mxu0 %v740
      %800 = vmatpush.bf16.msra.mxu0 %v738
      %801 = vmatpush.bf16.msra.mxu0 %v736
      %802 = vmatpush.bf16.msra.mxu0 %v734
      %803 = vmatpush.bf16.msra.mxu0 %v732
      %804 = vmatpush.bf16.msra.mxu0 %v730
      %805 = vmatmul.bf16.gmra.mxu0 %v672
      %v806 = vpop.f32.mrf.mxu0
      %v807 = vadd.f32 0.0, %v806
      %v808 = vpop.f32.mrf.mxu0
      %v809 = vadd.f32 0.0, %v808
      %810 = vdwg.mxu0
      %811 = vmatpush.bf16.msra.mxu0 0
      %812 = vmatpush.bf16.msra.mxu0 0
      %813 = vmatpush.bf16.msra.mxu0 0
      %814 = vmatpush.bf16.msra.mxu0 0
      %815 = vmatpush.bf16.msra.mxu0 0
      %816 = vmatpush.bf16.msra.mxu0 0
      %817 = vmatpush.bf16.msra.mxu0 0
      %818 = vmatpush.bf16.msra.mxu0 %v746
      %819 = vmatmul.bf16.gmra.mxu0 %v767
      %v820 = vpop.f32.mrf.mxu0
      %v821 = vadd.f32 %v807, %v820
      %v822 = vpop.f32.mrf.mxu0
      %v823 = vadd.f32 %v809, %v822
      %824 = vdwg.mxu0
      %v825 = vmax.f32 %v793, 0.0
      %v826 = vmax.f32 %v821, 0.0
      %v827 = vmax.f32 %v795, 0.0
      %v828 = vmax.f32 %v823, 0.0
      %v829 = vld [vmem:[%s2] sm:$0xf]
      %v830 = vld [vmem:[%s2 + $0x4] sm:$0xf]
      %v831 = vpack.c.bf16 %v827, %v825
      %v832 = vpack.c.bf16 %v828, %v826
      %v835 = vunpack.c.l.b16 %v829
      %v836 = vunpack.c.l.b16 %v830
      %v837 = vpack.c.b16 %v836, %v835
      %v839 = vsel %vm765, %v837, 0
      %841 = vmatpush.bf16.msra.mxu0 0
      %842 = vmatpush.bf16.msra.mxu0 0
      %843 = vmatpush.bf16.msra.mxu0 0
      %844 = vmatpush.bf16.msra.mxu0 0
      %845 = vmatpush.bf16.msra.mxu0 0
      %846 = vmatpush.bf16.msra.mxu0 0
      %847 = vmatpush.bf16.msra.mxu0 0
      %848 = vmatpush.bf16.msra.mxu0 %v831
      %849 = vmatmul.bf16.gmra.mxu0 %v839
      %v850 = vpop.f32.mrf.mxu0
      %v851 = vadd.f32 0.0, %v850
      %v852 = vpop.f32.mrf.mxu0
      %v853 = vadd.f32 0.0, %v852
      %854 = vdwg.mxu0
      %855 = vmatpush.bf16.msra.mxu0 0
      %856 = vmatpush.bf16.msra.mxu0 0
      %857 = vmatpush.bf16.msra.mxu0 0
      %858 = vmatpush.bf16.msra.mxu0 0
      %859 = vmatpush.bf16.msra.mxu0 0
      %860 = vmatpush.bf16.msra.mxu0 0
      %861 = vmatpush.bf16.msra.mxu0 0
      %862 = vmatpush.bf16.msra.mxu0 %v832
      %863 = vmatmul.bf16.gmra.mxu0 %v839
      %v864 = vpop.f32.mrf.mxu0
      %v865 = vadd.f32 0.0, %v864
      %v866 = vpop.f32.mrf.mxu0
      %v867 = vadd.f32 0.0, %v866
      %868 = vdwg.mxu0
      %v869 = vmax.f32 %v851, 0.0
      %v870 = vmax.f32 %v865, 0.0
      %v871 = vmax.f32 %v853, 0.0
      %v872 = vmax.f32 %v867, 0.0
      %v873 = vpack.c.bf16 %v870, %v869
      %v874 = vpack.c.bf16 %v872, %v871
      %875 = vst [vmem:[#allocation2 + $0x4] sm:$0xff] %v873
      %876 = vst [vmem:[#allocation2 + $0x14] sm:$0xff] %v874
      %v877 = vld [vmem:[#allocation2] sm:$0xff]
      %v878 = vld [vmem:[#allocation2 + $0x8] sm:$0xf]
      %v879 = vld [vmem:[#allocation2 + $0x10] sm:$0xff]
      %v880 = vld [vmem:[#allocation2 + $0x18] sm:$0xf]
      %v881 = vsel %vm348, %v877, 0
      %v882 = vsel %vm355, %v878, 0
      %v883 = vsel %vm348, %v879, 0
      %v884 = vsel %vm355, %v880, 0
      %v885 = vsel %vm377, %v877, 0
      %v886 = vsel %vm384, %v878, 0
      %v887 = vsel %vm377, %v879, 0
      %v888 = vsel %vm384, %v880, 0
      %v889 = vsel %vm400, %v877, 0
      %v890 = vsel %vm407, %v878, 0
      %v891 = vsel %vm400, %v879, 0
      %v892 = vsel %vm407, %v880, 0
      %v893 = vld [vmem:[#allocation2 + $0x4] sm:$0xff]
      %v894 = vld [vmem:[#allocation2 + $0xc] sm:$0xf]
      %v895 = vld [vmem:[#allocation2 + $0x14] sm:$0xff]
      %v896 = vld [vmem:[#allocation2 + $0x1c] sm:$0xf]
      %v897 = vsel %vm427, %v893, 0
      %v898 = vsel %vm434, %v894, 0
      %v899 = vsel %vm427, %v895, 0
      %v900 = vsel %vm434, %v896, 0
      %v901 = vsel %vm450, %v893, 0
      %v902 = vsel %vm457, %v894, 0
      %v903 = vsel %vm450, %v895, 0
      %v904 = vsel %vm457, %v896, 0
      %v905 = vsel %vm473, %v893, 0
      %v906 = vsel %vm480, %v894, 0
      %v907 = vsel %vm473, %v895, 0
      %v908 = vsel %vm480, %v896, 0
      %v913 = vunpack.c.l.b16 %v881
      %v914 = vunpack.c.h.b16 %v881
      %v915 = vunpack.c.l.b16 %v882
      %v916 = vunpack.c.l.b16 %v883
      %v917 = vunpack.c.h.b16 %v883
      %v918 = vunpack.c.l.b16 %v884
      %v919 = vpack.c.b16 %v916, %v913
      %v920 = vpack.c.b16 %v917, %v914
      %v921 = vpack.c.b16 %v918, %v915
      %v926 = vunpack.c.l.b16 %v877
      %v927 = vunpack.c.h.b16 %v877
      %v928 = vunpack.c.l.b16 %v878
      %v929 = vunpack.c.l.b16 %v879
      %v930 = vunpack.c.h.b16 %v879
      %v931 = vunpack.c.l.b16 %v880
      %v932 = vpack.c.b16 %v929, %v926
      %v933 = vpack.c.b16 %v930, %v927
      %v934 = vpack.c.b16 %v931, %v928
      %935 = vrot.lane.b32.xlu0 %v932, 127
      %v936 = vpop.permute.xlu0 %935
      %937 = vrot.lane.b32.xlu0 %v933, 127
      %v938 = vpop.permute.xlu0 %937
      %939 = vrot.lane.b32.xlu0 %v934, 127
      %v940 = vpop.permute.xlu0 %939
      %v941 = vsel %vm392, %v936, %v938
      %v942 = vsel %vm392, %v938, %v940
      %v947 = vunpack.c.l.b16 %v885
      %v948 = vunpack.c.h.b16 %v885
      %v949 = vunpack.c.l.b16 %v886
      %v950 = vunpack.c.l.b16 %v887
      %v951 = vunpack.c.h.b16 %v887
      %v952 = vunpack.c.l.b16 %v888
      %v953 = vpack.c.b16 %v950, %v947
      %v954 = vpack.c.b16 %v951, %v948
      %v955 = vpack.c.b16 %v952, %v949
      %956 = vrot.lane.b32.xlu0 %v953, 126
      %v957 = vpop.permute.xlu0 %956
      %958 = vrot.lane.b32.xlu0 %v954, 126
      %v959 = vpop.permute.xlu0 %958
      %960 = vrot.lane.b32.xlu0 %v955, 126
      %v961 = vpop.permute.xlu0 %960
      %v962 = vsel %vm538, %v957, %v959
      %v963 = vsel %vm538, %v959, %v961
      %v968 = vunpack.c.l.b16 %v889
      %v969 = vunpack.c.h.b16 %v889
      %v970 = vunpack.c.l.b16 %v890
      %v971 = vunpack.c.l.b16 %v891
      %v972 = vunpack.c.h.b16 %v891
      %v973 = vunpack.c.l.b16 %v892
      %v974 = vpack.c.b16 %v971, %v968
      %v975 = vpack.c.b16 %v972, %v969
      %v976 = vpack.c.b16 %v973, %v970
      %977 = vrot.lane.b32.xlu0 %v974, 112
      %v978 = vpop.permute.xlu0 %977
      %979 = vrot.lane.b32.xlu0 %v975, 112
      %v980 = vpop.permute.xlu0 %979
      %981 = vrot.lane.b32.xlu0 %v976, 112
      %v982 = vpop.permute.xlu0 %981
      %v983 = vsel %vm560, %v978, %v980
      %v984 = vsel %vm560, %v980, %v982
      %v987 = vunpack.c.l.b16 %v873
      %v988 = vunpack.c.h.b16 %v873
      %v989 = vunpack.c.l.b16 %v874
      %v990 = vunpack.c.h.b16 %v874
      %v991 = vpack.c.b16 %v989, %v987
      %v992 = vpack.c.b16 %v990, %v988
      %993 = vrot.lane.b32.xlu0 %v991, 111
      %v994 = vpop.permute.xlu0 %993
      %995 = vrot.lane.b32.xlu0 %v992, 111
      %v996 = vpop.permute.xlu0 %995
      %v997 = vsel %vm340, %v994, %v996
      %v1002 = vunpack.c.l.b16 %v897
      %v1003 = vunpack.c.h.b16 %v897
      %v1004 = vunpack.c.l.b16 %v898
      %v1005 = vunpack.c.l.b16 %v899
      %v1006 = vunpack.c.h.b16 %v899
      %v1007 = vunpack.c.l.b16 %v900
      %v1008 = vpack.c.b16 %v1005, %v1002
      %v1009 = vpack.c.b16 %v1006, %v1003
      %v1010 = vpack.c.b16 %v1007, %v1004
      %1011 = vrot.lane.b32.xlu0 %v1008, 110
      %v1012 = vpop.permute.xlu0 %1011
      %1013 = vrot.lane.b32.xlu0 %v1009, 110
      %v1014 = vpop.permute.xlu0 %1013
      %1015 = vrot.lane.b32.xlu0 %v1010, 110
      %v1016 = vpop.permute.xlu0 %1015
      %v1017 = vsel %vm595, %v1012, %v1014
      %v1018 = vsel %vm595, %v1014, %v1016
      %v1023 = vunpack.c.l.b16 %v901
      %v1024 = vunpack.c.h.b16 %v901
      %v1025 = vunpack.c.l.b16 %v902
      %v1026 = vunpack.c.l.b16 %v903
      %v1027 = vunpack.c.h.b16 %v903
      %v1028 = vunpack.c.l.b16 %v904
      %v1029 = vpack.c.b16 %v1026, %v1023
      %v1030 = vpack.c.b16 %v1027, %v1024
      %v1031 = vpack.c.b16 %v1028, %v1025
      %1032 = vrot.lane.b32.xlu0 %v1029, 96
      %v1033 = vpop.permute.xlu0 %1032
      %1034 = vrot.lane.b32.xlu0 %v1030, 96
      %v1035 = vpop.permute.xlu0 %1034
      %1036 = vrot.lane.b32.xlu0 %v1031, 96
      %v1037 = vpop.permute.xlu0 %1036
      %v1038 = vsel %vm617, %v1033, %v1035
      %v1039 = vsel %vm617, %v1035, %v1037
      %v1044 = vunpack.c.l.b16 %v893
      %v1045 = vunpack.c.h.b16 %v893
      %v1046 = vunpack.c.l.b16 %v894
      %v1047 = vunpack.c.l.b16 %v895
      %v1048 = vunpack.c.h.b16 %v895
      %v1049 = vunpack.c.l.b16 %v896
      %v1050 = vpack.c.b16 %v1047, %v1044
      %v1051 = vpack.c.b16 %v1048, %v1045
      %v1052 = vpack.c.b16 %v1049, %v1046
      %1053 = vrot.lane.b32.xlu0 %v1050, 95
      %v1054 = vpop.permute.xlu0 %1053
      %1055 = vrot.lane.b32.xlu0 %v1051, 95
      %v1056 = vpop.permute.xlu0 %1055
      %1057 = vrot.lane.b32.xlu0 %v1052, 95
      %v1058 = vpop.permute.xlu0 %1057
      %v1059 = vsel %vm639, %v1054, %v1056
      %v1060 = vsel %vm639, %v1056, %v1058
      %v1065 = vunpack.c.l.b16 %v905
      %v1066 = vunpack.c.h.b16 %v905
      %v1067 = vunpack.c.l.b16 %v906
      %v1068 = vunpack.c.l.b16 %v907
      %v1069 = vunpack.c.h.b16 %v907
      %v1070 = vunpack.c.l.b16 %v908
      %v1071 = vpack.c.b16 %v1068, %v1065
      %v1072 = vpack.c.b16 %v1069, %v1066
      %v1073 = vpack.c.b16 %v1070, %v1067
      %1074 = vrot.lane.b32.xlu0 %v1071, 94
      %v1075 = vpop.permute.xlu0 %1074
      %1076 = vrot.lane.b32.xlu0 %v1072, 94
      %v1077 = vpop.permute.xlu0 %1076
      %1078 = vrot.lane.b32.xlu0 %v1073, 94
      %v1079 = vpop.permute.xlu0 %1078
      %v1080 = vsel %vm661, %v1075, %v1077
      %v1081 = vsel %vm661, %v1077, %v1079
      %v1082 = vld [vmem:[%s3] sm:$0xff]
      %v1083 = vld [vmem:[%s3 + $0x8] sm:$0xff]
      %v1086 = vunpack.c.l.b16 %v1082
      %v1087 = vunpack.c.h.b16 %v1082
      %v1088 = vunpack.c.l.b16 %v1083
      %v1089 = vunpack.c.h.b16 %v1083
      %v1090 = vpack.c.b16 %v1088, %v1086
      %v1091 = vpack.c.b16 %v1089, %v1087
      %1093 = vrot.lane.b32.xlu0 %v919, 17
      %v1094 = vpop.permute.xlu0 %1093
      %1095 = vrot.lane.b32.xlu0 %v920, 17
      %v1096 = vpop.permute.xlu0 %1095
      %1097 = vrot.lane.b32.xlu0 %v921, 17
      %v1098 = vpop.permute.xlu0 %1097
      %1099 = vrot.lane.b32.xlu0 %v941, 17
      %v1100 = vpop.permute.xlu0 %1099
      %1101 = vrot.lane.b32.xlu0 %v942, 17
      %v1102 = vpop.permute.xlu0 %1101
      %1103 = vrot.lane.b32.xlu0 %v940, 17
      %v1104 = vpop.permute.xlu0 %1103
      %1105 = vrot.lane.b32.xlu0 %v962, 17
      %v1106 = vpop.permute.xlu0 %1105
      %1107 = vrot.lane.b32.xlu0 %v963, 17
      %v1108 = vpop.permute.xlu0 %1107
      %1109 = vrot.lane.b32.xlu0 %v961, 17
      %v1110 = vpop.permute.xlu0 %1109
      %1111 = vrot.lane.b32.xlu0 %v983, 17
      %v1112 = vpop.permute.xlu0 %1111
      %1113 = vrot.lane.b32.xlu0 %v984, 17
      %v1114 = vpop.permute.xlu0 %1113
      %1115 = vrot.lane.b32.xlu0 %v982, 17
      %v1116 = vpop.permute.xlu0 %1115
      %1117 = vrot.lane.b32.xlu0 %v994, 17
      %v1118 = vpop.permute.xlu0 %1117
      %1119 = vrot.lane.b32.xlu0 %v997, 17
      %v1120 = vpop.permute.xlu0 %1119
      %1121 = vrot.lane.b32.xlu0 %v996, 17
      %v1122 = vpop.permute.xlu0 %1121
      %1123 = vrot.lane.b32.xlu0 %v1012, 17
      %v1124 = vpop.permute.xlu0 %1123
      %1125 = vrot.lane.b32.xlu0 %v1017, 17
      %v1126 = vpop.permute.xlu0 %1125
      %1127 = vrot.lane.b32.xlu0 %v1018, 17
      %v1128 = vpop.permute.xlu0 %1127
      %1129 = vrot.lane.b32.xlu0 %v1033, 17
      %v1130 = vpop.permute.xlu0 %1129
      %1131 = vrot.lane.b32.xlu0 %v1038, 17
      %v1132 = vpop.permute.xlu0 %1131
      %1133 = vrot.lane.b32.xlu0 %v1039, 17
      %v1134 = vpop.permute.xlu0 %1133
      %1135 = vrot.lane.b32.xlu0 %v1054, 17
      %v1136 = vpop.permute.xlu0 %1135
      %1137 = vrot.lane.b32.xlu0 %v1059, 17
      %v1138 = vpop.permute.xlu0 %1137
      %1139 = vrot.lane.b32.xlu0 %v1060, 17
      %v1140 = vpop.permute.xlu0 %1139
      %1141 = vrot.lane.b32.xlu0 %v1075, 17
      %v1142 = vpop.permute.xlu0 %1141
      %1143 = vrot.lane.b32.xlu0 %v1080, 17
      %v1144 = vpop.permute.xlu0 %1143
      %1145 = vrot.lane.b32.xlu0 %v1081, 17
      %v1146 = vpop.permute.xlu0 %1145
      %v1147 = vsel %vm465, %v1094, %v1096
      %v1148 = vsel %vm465, %v1096, %v1098
      %v1149 = vsel %vm465, %v1100, %v1102
      %v1150 = vsel %vm465, %v1102, %v1104
      %v1151 = vsel %vm465, %v1106, %v1108
      %v1152 = vsel %vm465, %v1108, %v1110
      %v1153 = vsel %vm465, %v1112, %v1114
      %v1154 = vsel %vm465, %v1114, %v1116
      %v1155 = vsel %vm465, %v1118, %v1120
      %v1156 = vsel %vm465, %v1120, %v1122
      %v1157 = vsel %vm465, %v1124, %v1126
      %v1158 = vsel %vm465, %v1126, %v1128
      %v1159 = vsel %vm465, %v1130, %v1132
      %v1160 = vsel %vm465, %v1132, %v1134
      %v1161 = vsel %vm465, %v1136, %v1138
      %v1162 = vsel %vm465, %v1138, %v1140
      %v1163 = vsel %vm465, %v1142, %v1144
      %v1164 = vsel %vm465, %v1144, %v1146
      %v1184 = vsel %vm765, %v1091, 0
      %1186 = vmatpush.bf16.msra.mxu0 %v1161
      %1187 = vmatpush.bf16.msra.mxu0 %v1159
      %1188 = vmatpush.bf16.msra.mxu0 %v1157
      %1189 = vmatpush.bf16.msra.mxu0 %v1155
      %1190 = vmatpush.bf16.msra.mxu0 %v1153
      %1191 = vmatpush.bf16.msra.mxu0 %v1151
      %1192 = vmatpush.bf16.msra.mxu0 %v1149
      %1193 = vmatpush.bf16.msra.mxu0 %v1147
      %1194 = vmatmul.bf16.gmra.mxu0 %v1090
      %v1195 = vpop.f32.mrf.mxu0
      %v1196 = vadd.f32 0.0, %v1195
      %v1197 = vpop.f32.mrf.mxu0
      %v1198 = vadd.f32 0.0, %v1197
      %1199 = vdwg.mxu0
      %1200 = vmatpush.bf16.msra.mxu0 0
      %1201 = vmatpush.bf16.msra.mxu0 0
      %1202 = vmatpush.bf16.msra.mxu0 0
      %1203 = vmatpush.bf16.msra.mxu0 0
      %1204 = vmatpush.bf16.msra.mxu0 0
      %1205 = vmatpush.bf16.msra.mxu0 0
      %1206 = vmatpush.bf16.msra.mxu0 0
      %1207 = vmatpush.bf16.msra.mxu0 %v1163
      %1208 = vmatmul.bf16.gmra.mxu0 %v1184
      %v1209 = vpop.f32.mrf.mxu0
      %v1210 = vadd.f32 %v1196, %v1209
      %v1211 = vpop.f32.mrf.mxu0
      %v1212 = vadd.f32 %v1198, %v1211
      %1213 = vdwg.mxu0
      %1214 = vmatpush.bf16.msra.mxu0 %v1162
      %1215 = vmatpush.bf16.msra.mxu0 %v1160
      %1216 = vmatpush.bf16.msra.mxu0 %v1158
      %1217 = vmatpush.bf16.msra.mxu0 %v1156
      %1218 = vmatpush.bf16.msra.mxu0 %v1154
      %1219 = vmatpush.bf16.msra.mxu0 %v1152
      %1220 = vmatpush.bf16.msra.mxu0 %v1150
      %1221 = vmatpush.bf16.msra.mxu0 %v1148
      %1222 = vmatmul.bf16.gmra.mxu0 %v1090
      %v1223 = vpop.f32.mrf.mxu0
      %v1224 = vadd.f32 0.0, %v1223
      %v1225 = vpop.f32.mrf.mxu0
      %v1226 = vadd.f32 0.0, %v1225
      %1227 = vdwg.mxu0
      %1228 = vmatpush.bf16.msra.mxu0 0
      %1229 = vmatpush.bf16.msra.mxu0 0
      %1230 = vmatpush.bf16.msra.mxu0 0
      %1231 = vmatpush.bf16.msra.mxu0 0
      %1232 = vmatpush.bf16.msra.mxu0 0
      %1233 = vmatpush.bf16.msra.mxu0 0
      %1234 = vmatpush.bf16.msra.mxu0 0
      %1235 = vmatpush.bf16.msra.mxu0 %v1164
      %1236 = vmatmul.bf16.gmra.mxu0 %v1184
      %v1237 = vpop.f32.mrf.mxu0
      %v1238 = vadd.f32 %v1224, %v1237
      %v1239 = vpop.f32.mrf.mxu0
      %v1240 = vadd.f32 %v1226, %v1239
      %1241 = vdwg.mxu0
      %v1242 = vmax.f32 %v1210, 0.0
      %v1243 = vmax.f32 %v1238, 0.0
      %v1244 = vmax.f32 %v1212, 0.0
      %v1245 = vmax.f32 %v1240, 0.0
      %v1246 = vadd.f32 %v319, %v1242
      %v1247 = vadd.f32 %v320, %v1243
      %v1248 = vadd.f32 %v321, %v1244
      %v1249 = vadd.f32 %v322, %v1245
      %v1250 = vpack.c.bf16 %v1247, %v1246
      %v1251 = vpack.c.bf16 %v1249, %v1248
      %1252 = vst [vmem:[#allocation2 + $0x4] sm:$0xff] %v1250
      %1253 = vst [vmem:[#allocation2 + $0x14] sm:$0xff] %v1251
      %v1254 = vld [vmem:[#allocation2] sm:$0xff]
      %v1255 = vld [vmem:[#allocation2 + $0x8] sm:$0xf]
      %v1256 = vld [vmem:[#allocation2 + $0x10] sm:$0xff]
      %v1257 = vld [vmem:[#allocation2 + $0x18] sm:$0xf]
      %v1258 = vsel %vm348, %v1254, 0
      %v1259 = vsel %vm355, %v1255, 0
      %v1260 = vsel %vm348, %v1256, 0
      %v1261 = vsel %vm355, %v1257, 0
      %v1262 = vsel %vm377, %v1254, 0
      %v1263 = vsel %vm384, %v1255, 0
      %v1264 = vsel %vm377, %v1256, 0
      %v1265 = vsel %vm384, %v1257, 0
      %v1266 = vsel %vm400, %v1254, 0
      %v1267 = vsel %vm407, %v1255, 0
      %v1268 = vsel %vm400, %v1256, 0
      %v1269 = vsel %vm407, %v1257, 0
      %v1270 = vld [vmem:[#allocation2 + $0x4] sm:$0xff]
      %v1271 = vld [vmem:[#allocation2 + $0xc] sm:$0xf]
      %v1272 = vld [vmem:[#allocation2 + $0x14] sm:$0xff]
      %v1273 = vld [vmem:[#allocation2 + $0x1c] sm:$0xf]
      %v1274 = vsel %vm427, %v1270, 0
      %v1275 = vsel %vm434, %v1271, 0
      %v1276 = vsel %vm427, %v1272, 0
      %v1277 = vsel %vm434, %v1273, 0
      %v1278 = vsel %vm450, %v1270, 0
      %v1279 = vsel %vm457, %v1271, 0
      %v1280 = vsel %vm450, %v1272, 0
      %v1281 = vsel %vm457, %v1273, 0
      %v1282 = vsel %vm473, %v1270, 0
      %v1283 = vsel %vm480, %v1271, 0
      %v1284 = vsel %vm473, %v1272, 0
      %v1285 = vsel %vm480, %v1273, 0
      %v1290 = vunpack.c.l.b16 %v1258
      %v1291 = vunpack.c.h.b16 %v1258
      %v1292 = vunpack.c.l.b16 %v1259
      %v1293 = vunpack.c.l.b16 %v1260
      %v1294 = vunpack.c.h.b16 %v1260
      %v1295 = vunpack.c.l.b16 %v1261
      %v1296 = vpack.c.b16 %v1293, %v1290
      %v1297 = vpack.c.b16 %v1294, %v1291
      %v1298 = vpack.c.b16 %v1295, %v1292
      %v1303 = vunpack.c.l.b16 %v1254
      %v1304 = vunpack.c.h.b16 %v1254
      %v1305 = vunpack.c.l.b16 %v1255
      %v1306 = vunpack.c.l.b16 %v1256
      %v1307 = vunpack.c.h.b16 %v1256
      %v1308 = vunpack.c.l.b16 %v1257
      %v1309 = vpack.c.b16 %v1306, %v1303
      %v1310 = vpack.c.b16 %v1307, %v1304
      %v1311 = vpack.c.b16 %v1308, %v1305
      %1312 = vrot.lane.b32.xlu0 %v1309, 127
      %v1313 = vpop.permute.xlu0 %1312
      %1314 = vrot.lane.b32.xlu0 %v1310, 127
      %v1315 = vpop.permute.xlu0 %1314
      %1316 = vrot.lane.b32.xlu0 %v1311, 127
      %v1317 = vpop.permute.xlu0 %1316
      %v1318 = vsel %vm392, %v1313, %v1315
      %v1319 = vsel %vm392, %v1315, %v1317
      %v1324 = vunpack.c.l.b16 %v1262
      %v1325 = vunpack.c.h.b16 %v1262
      %v1326 = vunpack.c.l.b16 %v1263
      %v1327 = vunpack.c.l.b16 %v1264
      %v1328 = vunpack.c.h.b16 %v1264
      %v1329 = vunpack.c.l.b16 %v1265
      %v1330 = vpack.c.b16 %v1327, %v1324
      %v1331 = vpack.c.b16 %v1328, %v1325
      %v1332 = vpack.c.b16 %v1329, %v1326
      %1333 = vrot.lane.b32.xlu0 %v1330, 126
      %v1334 = vpop.permute.xlu0 %1333
      %1335 = vrot.lane.b32.xlu0 %v1331, 126
      %v1336 = vpop.permute.xlu0 %1335
      %1337 = vrot.lane.b32.xlu0 %v1332, 126
      %v1338 = vpop.permute.xlu0 %1337
      %v1339 = vsel %vm538, %v1334, %v1336
      %v1340 = vsel %vm538, %v1336, %v1338
      %v1345 = vunpack.c.l.b16 %v1266
      %v1346 = vunpack.c.h.b16 %v1266
      %v1347 = vunpack.c.l.b16 %v1267
      %v1348 = vunpack.c.l.b16 %v1268
      %v1349 = vunpack.c.h.b16 %v1268
      %v1350 = vunpack.c.l.b16 %v1269
      %v1351 = vpack.c.b16 %v1348, %v1345
      %v1352 = vpack.c.b16 %v1349, %v1346
      %v1353 = vpack.c.b16 %v1350, %v1347
      %1354 = vrot.lane.b32.xlu0 %v1351, 112
      %v1355 = vpop.permute.xlu0 %1354
      %1356 = vrot.lane.b32.xlu0 %v1352, 112
      %v1357 = vpop.permute.xlu0 %1356
      %1358 = vrot.lane.b32.xlu0 %v1353, 112
      %v1359 = vpop.permute.xlu0 %1358
      %v1360 = vsel %vm560, %v1355, %v1357
      %v1361 = vsel %vm560, %v1357, %v1359
      %v1364 = vunpack.c.l.b16 %v1250
      %v1365 = vunpack.c.h.b16 %v1250
      %v1366 = vunpack.c.l.b16 %v1251
      %v1367 = vunpack.c.h.b16 %v1251
      %v1368 = vpack.c.b16 %v1366, %v1364
      %v1369 = vpack.c.b16 %v1367, %v1365
      %1370 = vrot.lane.b32.xlu0 %v1368, 111
      %v1371 = vpop.permute.xlu0 %1370
      %1372 = vrot.lane.b32.xlu0 %v1369, 111
      %v1373 = vpop.permute.xlu0 %1372
      %v1374 = vsel %vm340, %v1371, %v1373
      %v1379 = vunpack.c.l.b16 %v1274
      %v1380 = vunpack.c.h.b16 %v1274
      %v1381 = vunpack.c.l.b16 %v1275
      %v1382 = vunpack.c.l.b16 %v1276
      %v1383 = vunpack.c.h.b16 %v1276
      %v1384 = vunpack.c.l.b16 %v1277
      %v1385 = vpack.c.b16 %v1382, %v1379
      %v1386 = vpack.c.b16 %v1383, %v1380
      %v1387 = vpack.c.b16 %v1384, %v1381
      %1388 = vrot.lane.b32.xlu0 %v1385, 110
      %v1389 = vpop.permute.xlu0 %1388
      %1390 = vrot.lane.b32.xlu0 %v1386, 110
      %v1391 = vpop.permute.xlu0 %1390
      %1392 = vrot.lane.b32.xlu0 %v1387, 110
      %v1393 = vpop.permute.xlu0 %1392
      %v1394 = vsel %vm595, %v1389, %v1391
      %v1395 = vsel %vm595, %v1391, %v1393
      %v1400 = vunpack.c.l.b16 %v1278
      %v1401 = vunpack.c.h.b16 %v1278
      %v1402 = vunpack.c.l.b16 %v1279
      %v1403 = vunpack.c.l.b16 %v1280
      %v1404 = vunpack.c.h.b16 %v1280
      %v1405 = vunpack.c.l.b16 %v1281
      %v1406 = vpack.c.b16 %v1403, %v1400
      %v1407 = vpack.c.b16 %v1404, %v1401
      %v1408 = vpack.c.b16 %v1405, %v1402
      %1409 = vrot.lane.b32.xlu0 %v1406, 96
      %v1410 = vpop.permute.xlu0 %1409
      %1411 = vrot.lane.b32.xlu0 %v1407, 96
      %v1412 = vpop.permute.xlu0 %1411
      %1413 = vrot.lane.b32.xlu0 %v1408, 96
      %v1414 = vpop.permute.xlu0 %1413
      %v1415 = vsel %vm617, %v1410, %v1412
      %v1416 = vsel %vm617, %v1412, %v1414
      %v1421 = vunpack.c.l.b16 %v1270
      %v1422 = vunpack.c.h.b16 %v1270
      %v1423 = vunpack.c.l.b16 %v1271
      %v1424 = vunpack.c.l.b16 %v1272
      %v1425 = vunpack.c.h.b16 %v1272
      %v1426 = vunpack.c.l.b16 %v1273
      %v1427 = vpack.c.b16 %v1424, %v1421
      %v1428 = vpack.c.b16 %v1425, %v1422
      %v1429 = vpack.c.b16 %v1426, %v1423
      %1430 = vrot.lane.b32.xlu0 %v1427, 95
      %v1431 = vpop.permute.xlu0 %1430
      %1432 = vrot.lane.b32.xlu0 %v1428, 95
      %v1433 = vpop.permute.xlu0 %1432
      %1434 = vrot.lane.b32.xlu0 %v1429, 95
      %v1435 = vpop.permute.xlu0 %1434
      %v1436 = vsel %vm639, %v1431, %v1433
      %v1437 = vsel %vm639, %v1433, %v1435
      %v1442 = vunpack.c.l.b16 %v1282
      %v1443 = vunpack.c.h.b16 %v1282
      %v1444 = vunpack.c.l.b16 %v1283
      %v1445 = vunpack.c.l.b16 %v1284
      %v1446 = vunpack.c.h.b16 %v1284
      %v1447 = vunpack.c.l.b16 %v1285
      %v1448 = vpack.c.b16 %v1445, %v1442
      %v1449 = vpack.c.b16 %v1446, %v1443
      %v1450 = vpack.c.b16 %v1447, %v1444
      %1451 = vrot.lane.b32.xlu0 %v1448, 94
      %v1452 = vpop.permute.xlu0 %1451
      %1453 = vrot.lane.b32.xlu0 %v1449, 94
      %v1454 = vpop.permute.xlu0 %1453
      %1455 = vrot.lane.b32.xlu0 %v1450, 94
      %v1456 = vpop.permute.xlu0 %1455
      %v1457 = vsel %vm661, %v1452, %v1454
      %v1458 = vsel %vm661, %v1454, %v1456
      %v1459 = vld [vmem:[%s4] sm:$0xff]
      %v1460 = vld [vmem:[%s4 + $0x8] sm:$0xff]
      %v1463 = vunpack.c.l.b16 %v1459
      %v1464 = vunpack.c.h.b16 %v1459
      %v1465 = vunpack.c.l.b16 %v1460
      %v1466 = vunpack.c.h.b16 %v1460
      %v1467 = vpack.c.b16 %v1465, %v1463
      %v1468 = vpack.c.b16 %v1466, %v1464
      %1470 = vrot.lane.b32.xlu0 %v1296, 17
      %v1471 = vpop.permute.xlu0 %1470
      %1472 = vrot.lane.b32.xlu0 %v1297, 17
      %v1473 = vpop.permute.xlu0 %1472
      %1474 = vrot.lane.b32.xlu0 %v1298, 17
      %v1475 = vpop.permute.xlu0 %1474
      %1476 = vrot.lane.b32.xlu0 %v1318, 17
      %v1477 = vpop.permute.xlu0 %1476
      %1478 = vrot.lane.b32.xlu0 %v1319, 17
      %v1479 = vpop.permute.xlu0 %1478
      %1480 = vrot.lane.b32.xlu0 %v1317, 17
      %v1481 = vpop.permute.xlu0 %1480
      %1482 = vrot.lane.b32.xlu0 %v1339, 17
      %v1483 = vpop.permute.xlu0 %1482
      %1484 = vrot.lane.b32.xlu0 %v1340, 17
      %v1485 = vpop.permute.xlu0 %1484
      %1486 = vrot.lane.b32.xlu0 %v1338, 17
      %v1487 = vpop.permute.xlu0 %1486
      %1488 = vrot.lane.b32.xlu0 %v1360, 17
      %v1489 = vpop.permute.xlu0 %1488
      %1490 = vrot.lane.b32.xlu0 %v1361, 17
      %v1491 = vpop.permute.xlu0 %1490
      %1492 = vrot.lane.b32.xlu0 %v1359, 17
      %v1493 = vpop.permute.xlu0 %1492
      %1494 = vrot.lane.b32.xlu0 %v1371, 17
      %v1495 = vpop.permute.xlu0 %1494
      %1496 = vrot.lane.b32.xlu0 %v1374, 17
      %v1497 = vpop.permute.xlu0 %1496
      %1498 = vrot.lane.b32.xlu0 %v1373, 17
      %v1499 = vpop.permute.xlu0 %1498
      %1500 = vrot.lane.b32.xlu0 %v1389, 17
      %v1501 = vpop.permute.xlu0 %1500
      %1502 = vrot.lane.b32.xlu0 %v1394, 17
      %v1503 = vpop.permute.xlu0 %1502
      %1504 = vrot.lane.b32.xlu0 %v1395, 17
      %v1505 = vpop.permute.xlu0 %1504
      %1506 = vrot.lane.b32.xlu0 %v1410, 17
      %v1507 = vpop.permute.xlu0 %1506
      %1508 = vrot.lane.b32.xlu0 %v1415, 17
      %v1509 = vpop.permute.xlu0 %1508
      %1510 = vrot.lane.b32.xlu0 %v1416, 17
      %v1511 = vpop.permute.xlu0 %1510
      %1512 = vrot.lane.b32.xlu0 %v1431, 17
      %v1513 = vpop.permute.xlu0 %1512
      %1514 = vrot.lane.b32.xlu0 %v1436, 17
      %v1515 = vpop.permute.xlu0 %1514
      %1516 = vrot.lane.b32.xlu0 %v1437, 17
      %v1517 = vpop.permute.xlu0 %1516
      %1518 = vrot.lane.b32.xlu0 %v1452, 17
      %v1519 = vpop.permute.xlu0 %1518
      %1520 = vrot.lane.b32.xlu0 %v1457, 17
      %v1521 = vpop.permute.xlu0 %1520
      %1522 = vrot.lane.b32.xlu0 %v1458, 17
      %v1523 = vpop.permute.xlu0 %1522
      %v1524 = vsel %vm465, %v1471, %v1473
      %v1525 = vsel %vm465, %v1473, %v1475
      %v1526 = vsel %vm465, %v1477, %v1479
      %v1527 = vsel %vm465, %v1479, %v1481
      %v1528 = vsel %vm465, %v1483, %v1485
      %v1529 = vsel %vm465, %v1485, %v1487
      %v1530 = vsel %vm465, %v1489, %v1491
      %v1531 = vsel %vm465, %v1491, %v1493
      %v1532 = vsel %vm465, %v1495, %v1497
      %v1533 = vsel %vm465, %v1497, %v1499
      %v1534 = vsel %vm465, %v1501, %v1503
      %v1535 = vsel %vm465, %v1503, %v1505
      %v1536 = vsel %vm465, %v1507, %v1509
      %v1537 = vsel %vm465, %v1509, %v1511
      %v1538 = vsel %vm465, %v1513, %v1515
      %v1539 = vsel %vm465, %v1515, %v1517
      %v1540 = vsel %vm465, %v1519, %v1521
      %v1541 = vsel %vm465, %v1521, %v1523
      %v1561 = vsel %vm765, %v1468, 0
      %1563 = vmatpush.bf16.msra.mxu0 %v1538
      %1564 = vmatpush.bf16.msra.mxu0 %v1536
      %1565 = vmatpush.bf16.msra.mxu0 %v1534
      %1566 = vmatpush.bf16.msra.mxu0 %v1532
      %1567 = vmatpush.bf16.msra.mxu0 %v1530
      %1568 = vmatpush.bf16.msra.mxu0 %v1528
      %1569 = vmatpush.bf16.msra.mxu0 %v1526
      %1570 = vmatpush.bf16.msra.mxu0 %v1524
      %1571 = vmatmul.bf16.gmra.mxu0 %v1467
      %v1572 = vpop.f32.mrf.mxu0
      %v1573 = vadd.f32 0.0, %v1572
      %v1574 = vpop.f32.mrf.mxu0
      %v1575 = vadd.f32 0.0, %v1574
      %1576 = vdwg.mxu0
      %1577 = vmatpush.bf16.msra.mxu0 0
      %1578 = vmatpush.bf16.msra.mxu0 0
      %1579 = vmatpush.bf16.msra.mxu0 0
      %1580 = vmatpush.bf16.msra.mxu0 0
      %1581 = vmatpush.bf16.msra.mxu0 0
      %1582 = vmatpush.bf16.msra.mxu0 0
      %1583 = vmatpush.bf16.msra.mxu0 0
      %1584 = vmatpush.bf16.msra.mxu0 %v1540
      %1585 = vmatmul.bf16.gmra.mxu0 %v1561
      %v1586 = vpop.f32.mrf.mxu0
      %v1587 = vadd.f32 %v1573, %v1586
      %v1588 = vpop.f32.mrf.mxu0
      %v1589 = vadd.f32 %v1575, %v1588
      %1590 = vdwg.mxu0
      %1591 = vmatpush.bf16.msra.mxu0 %v1539
      %1592 = vmatpush.bf16.msra.mxu0 %v1537
      %1593 = vmatpush.bf16.msra.mxu0 %v1535
      %1594 = vmatpush.bf16.msra.mxu0 %v1533
      %1595 = vmatpush.bf16.msra.mxu0 %v1531
      %1596 = vmatpush.bf16.msra.mxu0 %v1529
      %1597 = vmatpush.bf16.msra.mxu0 %v1527
      %1598 = vmatpush.bf16.msra.mxu0 %v1525
      %1599 = vmatmul.bf16.gmra.mxu0 %v1467
      %v1600 = vpop.f32.mrf.mxu0
      %v1601 = vadd.f32 0.0, %v1600
      %v1602 = vpop.f32.mrf.mxu0
      %v1603 = vadd.f32 0.0, %v1602
      %1604 = vdwg.mxu0
      %1605 = vmatpush.bf16.msra.mxu0 0
      %1606 = vmatpush.bf16.msra.mxu0 0
      %1607 = vmatpush.bf16.msra.mxu0 0
      %1608 = vmatpush.bf16.msra.mxu0 0
      %1609 = vmatpush.bf16.msra.mxu0 0
      %1610 = vmatpush.bf16.msra.mxu0 0
      %1611 = vmatpush.bf16.msra.mxu0 0
      %1612 = vmatpush.bf16.msra.mxu0 %v1541
      %1613 = vmatmul.bf16.gmra.mxu0 %v1561
      %v1614 = vpop.f32.mrf.mxu0
      %v1615 = vadd.f32 %v1601, %v1614
      %v1616 = vpop.f32.mrf.mxu0
      %v1617 = vadd.f32 %v1603, %v1616
      %1618 = vdwg.mxu0
      %v1619 = vmax.f32 %v1587, 0.0
      %v1620 = vmax.f32 %v1615, 0.0
      %v1621 = vmax.f32 %v1589, 0.0
      %v1622 = vmax.f32 %v1617, 0.0
      %v1623 = vld [vmem:[%s5] sm:$0xf]
      %v1624 = vld [vmem:[%s5 + $0x4] sm:$0xf]
      %v1625 = vpack.c.bf16 %v1621, %v1619
      %v1626 = vpack.c.bf16 %v1622, %v1620
      %v1629 = vunpack.c.l.b16 %v1623
      %v1630 = vunpack.c.l.b16 %v1624
      %v1631 = vpack.c.b16 %v1630, %v1629
      %v1633 = vsel %vm765, %v1631, 0
      %1635 = vmatpush.bf16.msra.mxu0 0
      %1636 = vmatpush.bf16.msra.mxu0 0
      %1637 = vmatpush.bf16.msra.mxu0 0
      %1638 = vmatpush.bf16.msra.mxu0 0
      %1639 = vmatpush.bf16.msra.mxu0 0
      %1640 = vmatpush.bf16.msra.mxu0 0
      %1641 = vmatpush.bf16.msra.mxu0 0
      %1642 = vmatpush.bf16.msra.mxu0 %v1625
      %1643 = vmatmul.bf16.gmra.mxu0 %v1633
      %v1644 = vpop.f32.mrf.mxu0
      %v1645 = vadd.f32 0.0, %v1644
      %v1646 = vpop.f32.mrf.mxu0
      %v1647 = vadd.f32 0.0, %v1646
      %1648 = vdwg.mxu0
      %1649 = vmatpush.bf16.msra.mxu0 0
      %1650 = vmatpush.bf16.msra.mxu0 0
      %1651 = vmatpush.bf16.msra.mxu0 0
      %1652 = vmatpush.bf16.msra.mxu0 0
      %1653 = vmatpush.bf16.msra.mxu0 0
      %1654 = vmatpush.bf16.msra.mxu0 0
      %1655 = vmatpush.bf16.msra.mxu0 0
      %1656 = vmatpush.bf16.msra.mxu0 %v1626
      %1657 = vmatmul.bf16.gmra.mxu0 %v1633
      %v1658 = vpop.f32.mrf.mxu0
      %v1659 = vadd.f32 0.0, %v1658
      %v1660 = vpop.f32.mrf.mxu0
      %v1661 = vadd.f32 0.0, %v1660
      %1662 = vdwg.mxu0
      %v1663 = vmax.f32 %v1645, 0.0
      %v1664 = vmax.f32 %v1659, 0.0
      %v1665 = vmax.f32 %v1647, 0.0
      %v1666 = vmax.f32 %v1661, 0.0
      %v1667 = vpack.c.bf16 %v1664, %v1663
      %v1668 = vpack.c.bf16 %v1666, %v1665
      %1669 = vst [vmem:[#allocation2 + $0x4] sm:$0xff] %v1667
      %1670 = vst [vmem:[#allocation2 + $0x14] sm:$0xff] %v1668
      %v1671 = vld [vmem:[#allocation2] sm:$0xff]
      %v1672 = vld [vmem:[#allocation2 + $0x8] sm:$0xf]
      %v1673 = vld [vmem:[#allocation2 + $0x10] sm:$0xff]
      %v1674 = vld [vmem:[#allocation2 + $0x18] sm:$0xf]
      %v1675 = vsel %vm348, %v1671, 0
      %v1676 = vsel %vm355, %v1672, 0
      %v1677 = vsel %vm348, %v1673, 0
      %v1678 = vsel %vm355, %v1674, 0
      %v1679 = vsel %vm377, %v1671, 0
      %v1680 = vsel %vm384, %v1672, 0
      %v1681 = vsel %vm377, %v1673, 0
      %v1682 = vsel %vm384, %v1674, 0
      %v1683 = vsel %vm400, %v1671, 0
      %v1684 = vsel %vm407, %v1672, 0
      %v1685 = vsel %vm400, %v1673, 0
      %v1686 = vsel %vm407, %v1674, 0
      %v1687 = vld [vmem:[#allocation2 + $0x4] sm:$0xff]
      %v1688 = vld [vmem:[#allocation2 + $0xc] sm:$0xf]
      %v1689 = vld [vmem:[#allocation2 + $0x14] sm:$0xff]
      %v1690 = vld [vmem:[#allocation2 + $0x1c] sm:$0xf]
      %v1691 = vsel %vm427, %v1687, 0
      %v1692 = vsel %vm434, %v1688, 0
      %v1693 = vsel %vm427, %v1689, 0
      %v1694 = vsel %vm434, %v1690, 0
      %v1695 = vsel %vm450, %v1687, 0
      %v1696 = vsel %vm457, %v1688, 0
      %v1697 = vsel %vm450, %v1689, 0
      %v1698 = vsel %vm457, %v1690, 0
      %v1699 = vsel %vm473, %v1687, 0
      %v1700 = vsel %vm480, %v1688, 0
      %v1701 = vsel %vm473, %v1689, 0
      %v1702 = vsel %vm480, %v1690, 0
      %v1707 = vunpack.c.l.b16 %v1675
      %v1708 = vunpack.c.h.b16 %v1675
      %v1709 = vunpack.c.l.b16 %v1676
      %v1710 = vunpack.c.l.b16 %v1677
      %v1711 = vunpack.c.h.b16 %v1677
      %v1712 = vunpack.c.l.b16 %v1678
      %v1713 = vpack.c.b16 %v1710, %v1707
      %v1714 = vpack.c.b16 %v1711, %v1708
      %v1715 = vpack.c.b16 %v1712, %v1709
      %v1720 = vunpack.c.l.b16 %v1671
      %v1721 = vunpack.c.h.b16 %v1671
      %v1722 = vunpack.c.l.b16 %v1672
      %v1723 = vunpack.c.l.b16 %v1673
      %v1724 = vunpack.c.h.b16 %v1673
      %v1725 = vunpack.c.l.b16 %v1674
      %v1726 = vpack.c.b16 %v1723, %v1720
      %v1727 = vpack.c.b16 %v1724, %v1721
      %v1728 = vpack.c.b16 %v1725, %v1722
      %1729 = vrot.lane.b32.xlu0 %v1726, 127
      %v1730 = vpop.permute.xlu0 %1729
      %1731 = vrot.lane.b32.xlu0 %v1727, 127
      %v1732 = vpop.permute.xlu0 %1731
      %1733 = vrot.lane.b32.xlu0 %v1728, 127
      %v1734 = vpop.permute.xlu0 %1733
      %v1735 = vsel %vm392, %v1730, %v1732
      %v1736 = vsel %vm392, %v1732, %v1734
      %v1741 = vunpack.c.l.b16 %v1679
      %v1742 = vunpack.c.h.b16 %v1679
      %v1743 = vunpack.c.l.b16 %v1680
      %v1744 = vunpack.c.l.b16 %v1681
      %v1745 = vunpack.c.h.b16 %v1681
      %v1746 = vunpack.c.l.b16 %v1682
      %v1747 = vpack.c.b16 %v1744, %v1741
      %v1748 = vpack.c.b16 %v1745, %v1742
      %v1749 = vpack.c.b16 %v1746, %v1743
      %1750 = vrot.lane.b32.xlu0 %v1747, 126
      %v1751 = vpop.permute.xlu0 %1750
      %1752 = vrot.lane.b32.xlu0 %v1748, 126
      %v1753 = vpop.permute.xlu0 %1752
      %1754 = vrot.lane.b32.xlu0 %v1749, 126
      %v1755 = vpop.permute.xlu0 %1754
      %v1756 = vsel %vm538, %v1751, %v1753
      %v1757 = vsel %vm538, %v1753, %v1755
      %v1762 = vunpack.c.l.b16 %v1683
      %v1763 = vunpack.c.h.b16 %v1683
      %v1764 = vunpack.c.l.b16 %v1684
      %v1765 = vunpack.c.l.b16 %v1685
      %v1766 = vunpack.c.h.b16 %v1685
      %v1767 = vunpack.c.l.b16 %v1686
      %v1768 = vpack.c.b16 %v1765, %v1762
      %v1769 = vpack.c.b16 %v1766, %v1763
      %v1770 = vpack.c.b16 %v1767, %v1764
      %1771 = vrot.lane.b32.xlu0 %v1768, 112
      %v1772 = vpop.permute.xlu0 %1771
      %1773 = vrot.lane.b32.xlu0 %v1769, 112
      %v1774 = vpop.permute.xlu0 %1773
      %1775 = vrot.lane.b32.xlu0 %v1770, 112
      %v1776 = vpop.permute.xlu0 %1775
      %v1777 = vsel %vm560, %v1772, %v1774
      %v1778 = vsel %vm560, %v1774, %v1776
      %v1781 = vunpack.c.l.b16 %v1667
      %v1782 = vunpack.c.h.b16 %v1667
      %v1783 = vunpack.c.l.b16 %v1668
      %v1784 = vunpack.c.h.b16 %v1668
      %v1785 = vpack.c.b16 %v1783, %v1781
      %v1786 = vpack.c.b16 %v1784, %v1782
      %1787 = vrot.lane.b32.xlu0 %v1785, 111
      %v1788 = vpop.permute.xlu0 %1787
      %1789 = vrot.lane.b32.xlu0 %v1786, 111
      %v1790 = vpop.permute.xlu0 %1789
      %v1791 = vsel %vm340, %v1788, %v1790
      %v1796 = vunpack.c.l.b16 %v1691
      %v1797 = vunpack.c.h.b16 %v1691
      %v1798 = vunpack.c.l.b16 %v1692
      %v1799 = vunpack.c.l.b16 %v1693
      %v1800 = vunpack.c.h.b16 %v1693
      %v1801 = vunpack.c.l.b16 %v1694
      %v1802 = vpack.c.b16 %v1799, %v1796
      %v1803 = vpack.c.b16 %v1800, %v1797
      %v1804 = vpack.c.b16 %v1801, %v1798
      %1805 = vrot.lane.b32.xlu0 %v1802, 110
      %v1806 = vpop.permute.xlu0 %1805
      %1807 = vrot.lane.b32.xlu0 %v1803, 110
      %v1808 = vpop.permute.xlu0 %1807
      %1809 = vrot.lane.b32.xlu0 %v1804, 110
      %v1810 = vpop.permute.xlu0 %1809
      %v1811 = vsel %vm595, %v1806, %v1808
      %v1812 = vsel %vm595, %v1808, %v1810
      %v1817 = vunpack.c.l.b16 %v1695
      %v1818 = vunpack.c.h.b16 %v1695
      %v1819 = vunpack.c.l.b16 %v1696
      %v1820 = vunpack.c.l.b16 %v1697
      %v1821 = vunpack.c.h.b16 %v1697
      %v1822 = vunpack.c.l.b16 %v1698
      %v1823 = vpack.c.b16 %v1820, %v1817
      %v1824 = vpack.c.b16 %v1821, %v1818
      %v1825 = vpack.c.b16 %v1822, %v1819
      %1826 = vrot.lane.b32.xlu0 %v1823, 96
      %v1827 = vpop.permute.xlu0 %1826
      %1828 = vrot.lane.b32.xlu0 %v1824, 96
      %v1829 = vpop.permute.xlu0 %1828
      %1830 = vrot.lane.b32.xlu0 %v1825, 96
      %v1831 = vpop.permute.xlu0 %1830
      %v1832 = vsel %vm617, %v1827, %v1829
      %v1833 = vsel %vm617, %v1829, %v1831
      %v1838 = vunpack.c.l.b16 %v1687
      %v1839 = vunpack.c.h.b16 %v1687
      %v1840 = vunpack.c.l.b16 %v1688
      %v1841 = vunpack.c.l.b16 %v1689
      %v1842 = vunpack.c.h.b16 %v1689
      %v1843 = vunpack.c.l.b16 %v1690
      %v1844 = vpack.c.b16 %v1841, %v1838
      %v1845 = vpack.c.b16 %v1842, %v1839
      %v1846 = vpack.c.b16 %v1843, %v1840
      %1847 = vrot.lane.b32.xlu0 %v1844, 95
      %v1848 = vpop.permute.xlu0 %1847
      %1849 = vrot.lane.b32.xlu0 %v1845, 95
      %v1850 = vpop.permute.xlu0 %1849
      %1851 = vrot.lane.b32.xlu0 %v1846, 95
      %v1852 = vpop.permute.xlu0 %1851
      %v1853 = vsel %vm639, %v1848, %v1850
      %v1854 = vsel %vm639, %v1850, %v1852
      %v1859 = vunpack.c.l.b16 %v1699
      %v1860 = vunpack.c.h.b16 %v1699
      %v1861 = vunpack.c.l.b16 %v1700
      %v1862 = vunpack.c.l.b16 %v1701
      %v1863 = vunpack.c.h.b16 %v1701
      %v1864 = vunpack.c.l.b16 %v1702
      %v1865 = vpack.c.b16 %v1862, %v1859
      %v1866 = vpack.c.b16 %v1863, %v1860
      %v1867 = vpack.c.b16 %v1864, %v1861
      %1868 = vrot.lane.b32.xlu0 %v1865, 94
      %v1869 = vpop.permute.xlu0 %1868
      %1870 = vrot.lane.b32.xlu0 %v1866, 94
      %v1871 = vpop.permute.xlu0 %1870
      %1872 = vrot.lane.b32.xlu0 %v1867, 94
      %v1873 = vpop.permute.xlu0 %1872
      %v1874 = vsel %vm661, %v1869, %v1871
      %v1875 = vsel %vm661, %v1871, %v1873
      %v1876 = vld [vmem:[%s6] sm:$0xff]
      %v1877 = vld [vmem:[%s6 + $0x8] sm:$0xff]
      %v1880 = vunpack.c.l.b16 %v1876
      %v1881 = vunpack.c.h.b16 %v1876
      %v1882 = vunpack.c.l.b16 %v1877
      %v1883 = vunpack.c.h.b16 %v1877
      %v1884 = vpack.c.b16 %v1882, %v1880
      %v1885 = vpack.c.b16 %v1883, %v1881
      %1887 = vrot.lane.b32.xlu0 %v1713, 17
      %v1888 = vpop.permute.xlu0 %1887
      %1889 = vrot.lane.b32.xlu0 %v1714, 17
      %v1890 = vpop.permute.xlu0 %1889
      %1891 = vrot.lane.b32.xlu0 %v1715, 17
      %v1892 = vpop.permute.xlu0 %1891
      %1893 = vrot.lane.b32.xlu0 %v1735, 17
      %v1894 = vpop.permute.xlu0 %1893
      %1895 = vrot.lane.b32.xlu0 %v1736, 17
      %v1896 = vpop.permute.xlu0 %1895
      %1897 = vrot.lane.b32.xlu0 %v1734, 17
      %v1898 = vpop.permute.xlu0 %1897
      %1899 = vrot.lane.b32.xlu0 %v1756, 17
      %v1900 = vpop.permute.xlu0 %1899
      %1901 = vrot.lane.b32.xlu0 %v1757, 17
      %v1902 = vpop.permute.xlu0 %1901
      %1903 = vrot.lane.b32.xlu0 %v1755, 17
      %v1904 = vpop.permute.xlu0 %1903
      %1905 = vrot.lane.b32.xlu0 %v1777, 17
      %v1906 = vpop.permute.xlu0 %1905
      %1907 = vrot.lane.b32.xlu0 %v1778, 17
      %v1908 = vpop.permute.xlu0 %1907
      %1909 = vrot.lane.b32.xlu0 %v1776, 17
      %v1910 = vpop.permute.xlu0 %1909
      %1911 = vrot.lane.b32.xlu0 %v1788, 17
      %v1912 = vpop.permute.xlu0 %1911
      %1913 = vrot.lane.b32.xlu0 %v1791, 17
      %v1914 = vpop.permute.xlu0 %1913
      %1915 = vrot.lane.b32.xlu0 %v1790, 17
      %v1916 = vpop.permute.xlu0 %1915
      %1917 = vrot.lane.b32.xlu0 %v1806, 17
      %v1918 = vpop.permute.xlu0 %1917
      %1919 = vrot.lane.b32.xlu0 %v1811, 17
      %v1920 = vpop.permute.xlu0 %1919
      %1921 = vrot.lane.b32.xlu0 %v1812, 17
      %v1922 = vpop.permute.xlu0 %1921
      %1923 = vrot.lane.b32.xlu0 %v1827, 17
      %v1924 = vpop.permute.xlu0 %1923
      %1925 = vrot.lane.b32.xlu0 %v1832, 17
      %v1926 = vpop.permute.xlu0 %1925
      %1927 = vrot.lane.b32.xlu0 %v1833, 17
      %v1928 = vpop.permute.xlu0 %1927
      %1929 = vrot.lane.b32.xlu0 %v1848, 17
      %v1930 = vpop.permute.xlu0 %1929
      %1931 = vrot.lane.b32.xlu0 %v1853, 17
      %v1932 = vpop.permute.xlu0 %1931
      %1933 = vrot.lane.b32.xlu0 %v1854, 17
      %v1934 = vpop.permute.xlu0 %1933
      %1935 = vrot.lane.b32.xlu0 %v1869, 17
      %v1936 = vpop.permute.xlu0 %1935
      %1937 = vrot.lane.b32.xlu0 %v1874, 17
      %v1938 = vpop.permute.xlu0 %1937
      %1939 = vrot.lane.b32.xlu0 %v1875, 17
      %v1940 = vpop.permute.xlu0 %1939
      %v1941 = vsel %vm465, %v1888, %v1890
      %v1942 = vsel %vm465, %v1890, %v1892
      %v1943 = vsel %vm465, %v1894, %v1896
      %v1944 = vsel %vm465, %v1896, %v1898
      %v1945 = vsel %vm465, %v1900, %v1902
      %v1946 = vsel %vm465, %v1902, %v1904
      %v1947 = vsel %vm465, %v1906, %v1908
      %v1948 = vsel %vm465, %v1908, %v1910
      %v1949 = vsel %vm465, %v1912, %v1914
      %v1950 = vsel %vm465, %v1914, %v1916
      %v1951 = vsel %vm465, %v1918, %v1920
      %v1952 = vsel %vm465, %v1920, %v1922
      %v1953 = vsel %vm465, %v1924, %v1926
      %v1954 = vsel %vm465, %v1926, %v1928
      %v1955 = vsel %vm465, %v1930, %v1932
      %v1956 = vsel %vm465, %v1932, %v1934
      %v1957 = vsel %vm465, %v1936, %v1938
      %v1958 = vsel %vm465, %v1938, %v1940
      %v1978 = vsel %vm765, %v1885, 0
      %1980 = vmatpush.bf16.msra.mxu0 %v1955
      %1981 = vmatpush.bf16.msra.mxu0 %v1953
      %1982 = vmatpush.bf16.msra.mxu0 %v1951
      %1983 = vmatpush.bf16.msra.mxu0 %v1949
      %1984 = vmatpush.bf16.msra.mxu0 %v1947
      %1985 = vmatpush.bf16.msra.mxu0 %v1945
      %1986 = vmatpush.bf16.msra.mxu0 %v1943
      %1987 = vmatpush.bf16.msra.mxu0 %v1941
      %1988 = vmatmul.bf16.gmra.mxu0 %v1884
      %v1989 = vpop.f32.mrf.mxu0
      %v1990 = vadd.f32 0.0, %v1989
      %v1991 = vpop.f32.mrf.mxu0
      %1992 = vdwg.mxu0
      %1993 = vmatpush.bf16.msra.mxu0 0
      %1994 = vmatpush.bf16.msra.mxu0 0
      %1995 = vmatpush.bf16.msra.mxu0 0
      %1996 = vmatpush.bf16.msra.mxu0 0
      %1997 = vmatpush.bf16.msra.mxu0 0
      %1998 = vmatpush.bf16.msra.mxu0 0
      %1999 = vmatpush.bf16.msra.mxu0 0
      %2000 = vmatpush.bf16.msra.mxu0 %v1957
      %2001 = vmatmul.bf16.gmra.mxu0 %v1978
      %v2002 = vpop.f32.mrf.mxu0
      %v2003 = vadd.f32 %v1990, %v2002
      %v2004 = vpop.f32.mrf.mxu0
      %2005 = vdwg.mxu0
      %2006 = vmatpush.bf16.msra.mxu0 %v1956
      %2007 = vmatpush.bf16.msra.mxu0 %v1954
      %2008 = vmatpush.bf16.msra.mxu0 %v1952
      %2009 = vmatpush.bf16.msra.mxu0 %v1950
      %2010 = vmatpush.bf16.msra.mxu0 %v1948
      %2011 = vmatpush.bf16.msra.mxu0 %v1946
      %2012 = vmatpush.bf16.msra.mxu0 %v1944
      %2013 = vmatpush.bf16.msra.mxu0 %v1942
      %2014 = vmatmul.bf16.gmra.mxu0 %v1884
      %v2015 = vpop.f32.mrf.mxu0
      %v2016 = vadd.f32 0.0, %v2015
      %v2017 = vpop.f32.mrf.mxu0
      %2018 = vdwg.mxu0
      %2019 = vmatpush.bf16.msra.mxu0 0
      %2020 = vmatpush.bf16.msra.mxu0 0
      %2021 = vmatpush.bf16.msra.mxu0 0
      %2022 = vmatpush.bf16.msra.mxu0 0
      %2023 = vmatpush.bf16.msra.mxu0 0
      %2024 = vmatpush.bf16.msra.mxu0 0
      %2025 = vmatpush.bf16.msra.mxu0 0
      %2026 = vmatpush.bf16.msra.mxu0 %v1958
      %2027 = vmatmul.bf16.gmra.mxu0 %v1978
      %v2028 = vpop.f32.mrf.mxu0
      %v2029 = vadd.f32 %v2016, %v2028
      %v2030 = vpop.f32.mrf.mxu0
      %2031 = vdwg.mxu0
      %v2034 = vrot.slane %v2029, 7
      %vm2035 = vcmask 1040384
      %v2036 = vsel %vm2035, %v2003, %v2034
      %v2038 = vlaneseq
      %vm2039 = vcmp.ge.s32.totalorder %v2038, 0
      %vm2040 = vcmp.lt.s32.totalorder %v2038, 256
      %vm2041 = vmand %vm2039, %vm2040
      %2042 = vst.msk [vmem:[%s276] sm:$0x3] %vm2041, %v2036
      %p2043 = scmp.lt.s32.totalorder %s18, 1
      %s2044 = scalar_select %p2043, %s18, 1
      %s2045 = smul.addr %s2044, 2
      %s2046 = scalar_lea.vmem %s7, %s2045
      // Predicated region
      $region53: #{spark_netv3_forward.1} parent=47 // pred_check
        %p2047 = pneg %p188
      $region54: #{spark_netv3_forward.1} parent=47 // pred_check_branch
        %2049 = sbr.rel (%p2047) target = $region56
      $region55: #{spark_netv3_forward.1} parent=47 // pred_region
        _
      $region56: #{spark_netv3_forward.1} parent=47 // pred_fallthru
        _
    $region48: #{spark_netv3_forward.1} parent=5 // pred_fallthru
      _
    %p2050 = scmp.le.s32.totalorder 2, %s13
    // Predicated region
    $region57: #{spark_netv3_forward.1} parent=5 // pred_check
      %p2051 = pneg %p2050
    $region58: #{spark_netv3_forward.1} parent=5 // pred_check_branch
      %2053 = sbr.rel (%p2051) target = $region60
    $region59: #{spark_netv3_forward.1} parent=5 // pred_region
      %s2054 = ssub.s32 %s13, 2
      // Predicated region
      $region61: #{spark_netv3_forward.1} parent=59 // pred_check
        %p2055 = pneg %p194
      $region62: #{spark_netv3_forward.1} parent=59 // pred_check_branch
        %2057 = sbr.rel (%p2055) target = $region64
      $region63: #{spark_netv3_forward.1} parent=59 // pred_region
        %p2058 = scmp.lt.s32.totalorder %s19, 1
        %s2059 = scalar_select %p2058, %s19, 1
        %s2060 = smul.addr %s2059, 2
        %s2061 = scalar_lea.vmem %s7, %s2060
      $region64: #{spark_netv3_forward.1} parent=59 // pred_fallthru
        _
    $region60: #{spark_netv3_forward.1} parent=5 // pred_fallthru
      _
  $region6: #{spark_netv3_forward.1} parent=0 // loop_footer
    %s17 = sadd.s32 1, %s13
  $region7: #{spark_netv3_forward.1} parent=0 // loop_footer_branch
    %12 = sbr.rel target = $region3
  $region8: #{spark_netv3_forward.1} parent=0 // loop_exit
    _

</llo_original>
